<compile_context>
chip_gen: v7x
topology: tpu7x:2x2x1
jax: 0.10.0
libtpu: 0.0.40
codegen_flags: <defaults>
</compile_context>

<pallas_src>
import jax
import jax.numpy as jnp
from jax.experimental import pallas as pl
from jax.experimental.pallas import tpu as pltpu

D_HID = 512
MAX_TM = 2048  # max batch-tile rows (multiple of 128)


def _fwd_kernel(x_ref, p1_ref, w12_ref, w34_ref, b_ref, o_ref):
    """3-matmul fused forward for one batch tile. f32 accumulation on the MXU."""
    b = b_ref[...]                                    # (1, D) f32, hoisted once
    x = x_ref[...].astype(jnp.bfloat16)               # in-kernel cast (no wrapper pass)
    # stage 0: relu(x @ p1)
    h = jnp.dot(x, p1_ref[...], preferred_element_type=jnp.float32)
    h = jnp.maximum(h, 0.0)
    # stage 1: (h @ p1) @ W^T + b  ==  h @ W12 + b
    h = jnp.dot(h.astype(jnp.bfloat16), w12_ref[...],
                preferred_element_type=jnp.float32) + b
    # stage 2+3: (relu(h) @ p2) @ W^T + b  ==  relu(h) @ W34 + b, then relu
    h = jnp.maximum(h, 0.0)
    h = jnp.dot(h.astype(jnp.bfloat16), w34_ref[...],
                preferred_element_type=jnp.float32) + b
    h = jnp.maximum(h, 0.0)
    o_ref[...] = h.astype(o_ref.dtype)


def prepare_params(mm_param, mm_param2, lin_w, lin_b):
    """One-time weight prepack (hoisted out of the per-call path).

    W12 = mm_param @ W^T and W34 = mm_param2 @ W^T fold the associativity-
    fusable matmul pairs.  All weights stored bf16 (native MXU path); products
    are computed in f32 then cast once.
    """
    p1 = mm_param.astype(jnp.bfloat16)
    w12 = jnp.dot(mm_param, lin_w.T,
                  preferred_element_type=jnp.float32).astype(jnp.bfloat16)
    w34 = jnp.dot(mm_param2, lin_w.T,
                  preferred_element_type=jnp.float32).astype(jnp.bfloat16)
    b2d = lin_b.reshape(1, D_HID).astype(jnp.float32)
    return p1, w12, w34, b2d


def _round_up(x, m):
    return ((x + m - 1) // m) * m


def _pick_tm(m):
    if m <= 256:
        return m                       # single tile; block dim == full array dim
    # >= 2 grid steps so v7x megacore can shard the batch axis; tiles are
    # multiples of 128, capped at MAX_TM to amortize per-step overhead.
    return min(MAX_TM, _round_up(pl.cdiv(m, 2), 128))


def example_code_forward(x, params, *, tm=None, out_dtype=None):
    p1, w12, w34, b2d = params
    M, D = x.shape
    assert D == D_HID
    if out_dtype is None:
        out_dtype = x.dtype            # keep reference numerical contract; bf16 is opt-in
    if tm is None:
        tm = _pick_tm(M)

    grid = (pl.cdiv(M, tm),)           # ragged last tile handled by Pallas masked writes

    w_spec = pl.BlockSpec((D_HID, D_HID), lambda i: (0, 0))   # resident weights
    out = pl.pallas_call(
        _fwd_kernel,
        out_shape=jax.ShapeDtypeStruct((M, D), out_dtype),
        grid_spec=pltpu.PrefetchScalarGridSpec(
            num_scalar_prefetch=0,
            grid=grid,
            in_specs=[
                pl.BlockSpec((tm, D), lambda i: (i, 0)),      # x batch tile
                w_spec,                                       # p1
                w_spec,                                       # W12
                w_spec,                                       # W34
                pl.BlockSpec((1, D), lambda i: (0, 0)),       # bias
            ],
            out_specs=pl.BlockSpec((tm, D), lambda i: (i, 0)),
        ),
        compiler_params=pltpu.CompilerParams(
            dimension_semantics=("parallel",),    # megacore shards batch tiles
            vmem_limit_bytes=32 * 1024 * 1024,    # safe on v5e/v6e/v7x
        ),
    )(x, p1, w12, w34, b2d)
    return out


def reference_forward(x, mm_param, mm_param2, lin_w, lin_b):
    h = jnp.maximum(x @ mm_param, 0.0)
    h = (h @ mm_param) @ lin_w.T + lin_b
    h = jnp.maximum(h, 0.0) @ mm_param2
    h = h @ lin_w.T + lin_b
    return jnp.maximum(h, 0.0)


if __name__ == "__main__":
    key = jax.random.PRNGKey(0)
    k_x, k_p1, k_p2, k_w, k_b = jax.random.split(key, 5)

    # Deterministic synthetic parameters (shapes per ExampleCode.__init__),
    # scaled so activations stay O(1) through the matmul chain.
    mm_param = jax.random.normal(k_p1, (D_HID, D_HID), dtype=jnp.float32) * 0.05
    mm_param2 = jax.random.normal(k_p2, (D_HID, D_HID), dtype=jnp.float32) * 0.05
    lin_w = jax.random.normal(k_w, (D_HID, D_HID), dtype=jnp.float32) * 0.05
    lin_b = jax.random.normal(k_b, (D_HID,), dtype=jnp.float32) * 0.05

    # Prepack once (per review: not in the per-forward path).
    params = prepare_params(mm_param, mm_param2, lin_w, lin_b)

    # bf16 MXU path + W12/W34 fusion rounding vs f32 reference -> loosened tolerance.
    RTOL, ATOL = 5e-2, 5e-2

    # 1) Small-batch / latency path: single tile (tm == M), grid=(1,).
    x_small = jax.random.normal(k_x, (8, D_HID), dtype=jnp.float32)
    out_s = jax.block_until_ready(example_code_forward(x_small, params))
    ref_s = reference_forward(x_small, mm_param, mm_param2, lin_w, lin_b)
    assert out_s.shape == (8, D_HID) and out_s.dtype == x_small.dtype
    assert jnp.allclose(out_s, ref_s, rtol=RTOL, atol=ATOL), "small-batch mismatch"

    # 2) Tiled path: M=1024 -> tm=512, grid=(2,) (both TCs on v7x).
    x_big = jax.random.normal(k_x, (1024, D_HID), dtype=jnp.float32)
    out_b = jax.block_until_ready(example_code_forward(x_big, params))
    ref_b = reference_forward(x_big, mm_param, mm_param2, lin_w, lin_b)
    assert out_b.shape == (1024, D_HID)
    assert jnp.allclose(out_b, ref_b, rtol=RTOL, atol=ATOL), "tiled-batch mismatch"

    print("KERNEL_OK")
</pallas_src>

<mosaic_0001>
module attributes {stable_mosaic.version = 11 : i64} {
  func.func @_fwd_kernel(%arg0: i32, %arg1: memref<8x512xf32, #tpu.memory_space<vmem>>, %arg2: memref<512x512xbf16, #tpu.memory_space<vmem>>, %arg3: memref<512x512xbf16, #tpu.memory_space<vmem>>, %arg4: memref<512x512xbf16, #tpu.memory_space<vmem>>, %arg5: memref<1x512xf32, #tpu.memory_space<vmem>>, %arg6: memref<8x512xf32, #tpu.memory_space<vmem>>) attributes {dimension_semantics = [#tpu.dimension_semantics<parallel>], iteration_bounds = array<i64: 1>, scalar_prefetch = 0 : i64, scratch_operands = 0 : i64, tpu.core_type = #tpu.core_type<tc>, window_params = [{transform_indices = @transform_0, window_bounds = array<i64: 8, 512>}, {pipeline_mode = #tpu.pipeline_mode<synchronous>, transform_indices = @transform_1, window_bounds = array<i64: 512, 512>}, {pipeline_mode = #tpu.pipeline_mode<synchronous>, transform_indices = @transform_2, window_bounds = array<i64: 512, 512>}, {pipeline_mode = #tpu.pipeline_mode<synchronous>, transform_indices = @transform_3, window_bounds = array<i64: 512, 512>}, {pipeline_mode = #tpu.pipeline_mode<synchronous>, transform_indices = @transform_4, window_bounds = array<i64: 1, 512>}, {transform_indices = @transform_5, window_bounds = array<i64: 8, 512>}]} {
    %c0 = arith.constant 0 : index
    %c0_0 = arith.constant 0 : index
    %0 = vector.load %arg5[%c0, %c0_0] : memref<1x512xf32, #tpu.memory_space<vmem>>, vector<1x512xf32>
    %c0_1 = arith.constant 0 : index
    %c0_2 = arith.constant 0 : index
    %1 = vector.load %arg1[%c0_1, %c0_2] : memref<8x512xf32, #tpu.memory_space<vmem>>, vector<8x512xf32>
    %2 = arith.truncf %1 : vector<8x512xf32> to vector<8x512xbf16>
    %c0_3 = arith.constant 0 : index
    %c0_4 = arith.constant 0 : index
    %3 = vector.load %arg2[%c0_3, %c0_4] : memref<512x512xbf16, #tpu.memory_space<vmem>>, vector<512x512xbf16>
    %cst = arith.constant dense<0.000000e+00> : vector<8x512xf32>
    %4 = tpu.matmul %2, %3, %cst {dimension_numbers = #tpu.dot_dimension_numbers<[1], [0], [0], [1], [0, 0, 1, 1], [], []>} : vector<8x512xbf16>, vector<512x512xbf16>, vector<8x512xf32> -> vector<8x512xf32>
    %cst_5 = arith.constant 0.000000e+00 : f32
    %5 = vector.broadcast %cst_5 : f32 to vector<8x512xf32>
    %6 = arith.maximumf %4, %5 : vector<8x512xf32>
    %7 = arith.truncf %6 : vector<8x512xf32> to vector<8x512xbf16>
    %c0_6 = arith.constant 0 : index
    %c0_7 = arith.constant 0 : index
    %8 = vector.load %arg3[%c0_6, %c0_7] : memref<512x512xbf16, #tpu.memory_space<vmem>>, vector<512x512xbf16>
    %cst_8 = arith.constant dense<0.000000e+00> : vector<8x512xf32>
    %9 = tpu.matmul %7, %8, %cst_8 {dimension_numbers = #tpu.dot_dimension_numbers<[1], [0], [0], [1], [0, 0, 1, 1], [], []>} : vector<8x512xbf16>, vector<512x512xbf16>, vector<8x512xf32> -> vector<8x512xf32>
    %10 = vector.broadcast %0 : vector<1x512xf32> to vector<8x512xf32>
    %11 = arith.addf %9, %10 : vector<8x512xf32>
    %cst_9 = arith.constant 0.000000e+00 : f32
    %12 = vector.broadcast %cst_9 : f32 to vector<8x512xf32>
    %13 = arith.maximumf %11, %12 : vector<8x512xf32>
    %14 = arith.truncf %13 : vector<8x512xf32> to vector<8x512xbf16>
    %c0_10 = arith.constant 0 : index
    %c0_11 = arith.constant 0 : index
    %15 = vector.load %arg4[%c0_10, %c0_11] : memref<512x512xbf16, #tpu.memory_space<vmem>>, vector<512x512xbf16>
    %cst_12 = arith.constant dense<0.000000e+00> : vector<8x512xf32>
    %16 = tpu.matmul %14, %15, %cst_12 {dimension_numbers = #tpu.dot_dimension_numbers<[1], [0], [0], [1], [0, 0, 1, 1], [], []>} : vector<8x512xbf16>, vector<512x512xbf16>, vector<8x512xf32> -> vector<8x512xf32>
    %17 = vector.broadcast %0 : vector<1x512xf32> to vector<8x512xf32>
    %18 = arith.addf %16, %17 : vector<8x512xf32>
    %cst_13 = arith.constant 0.000000e+00 : f32
    %19 = vector.broadcast %cst_13 : f32 to vector<8x512xf32>
    %20 = arith.maximumf %18, %19 : vector<8x512xf32>
    %c0_14 = arith.constant 0 : index
    %c0_15 = arith.constant 0 : index
    %21 = vector.load %arg6[%c0_14, %c0_15] : memref<8x512xf32, #tpu.memory_space<vmem>>, vector<8x512xf32>
    tpu.vector_store %arg6[%c0_14, %c0_15], %20 {strides = array<i32>} : memref<8x512xf32, #tpu.memory_space<vmem>>, vector<8x512xf32>,
    return
  }
  func.func @transform_0(%arg0: i32) -> (i32, i32) {
    %c0_i32 = arith.constant 0 : i32
    %c0_i32_0 = arith.constant 0 : i32
    return %arg0, %c0_i32 : i32, i32
  }
  func.func @transform_1(%arg0: i32) -> (i32, i32) {
    %c0_i32 = arith.constant 0 : i32
    %c0_i32_0 = arith.constant 0 : i32
    %c0_i32_1 = arith.constant 0 : i32
    return %c0_i32, %c0_i32_0 : i32, i32
  }
  func.func @transform_2(%arg0: i32) -> (i32, i32) {
    %c0_i32 = arith.constant 0 : i32
    %c0_i32_0 = arith.constant 0 : i32
    %c0_i32_1 = arith.constant 0 : i32
    return %c0_i32, %c0_i32_0 : i32, i32
  }
  func.func @transform_3(%arg0: i32) -> (i32, i32) {
    %c0_i32 = arith.constant 0 : i32
    %c0_i32_0 = arith.constant 0 : i32
    %c0_i32_1 = arith.constant 0 : i32
    return %c0_i32, %c0_i32_0 : i32, i32
  }
  func.func @transform_4(%arg0: i32) -> (i32, i32) {
    %c0_i32 = arith.constant 0 : i32
    %c0_i32_0 = arith.constant 0 : i32
    %c0_i32_1 = arith.constant 0 : i32
    return %c0_i32, %c0_i32_0 : i32, i32
  }
  func.func @transform_5(%arg0: i32) -> (i32, i32) {
    %c0_i32 = arith.constant 0 : i32
    %c0_i32_0 = arith.constant 0 : i32
    return %arg0, %c0_i32 : i32, i32
  }
}

</mosaic_0001>

<llo_original>
// kernel: tpu_custom_call.1
$region0: #{tpu_custom_call.1}
  #allocation0 [shape = 'u32[]', space=smem, size = 0x4, offset = 0x4, fixed_abs, tag = 'smem constant byte address 0x4 - core index']
  #allocation1 [shape = 'u32[144,128]{1,0:T(1,128)}', space=vmem, size = 0x12000, scoped, tag = 'internal scratch']
  %s0 = inlined_call_operand.hbm [shape: f32[8,512], index: 0, kind: input, shape index: {}]
  %s1 = inlined_call_operand.hbm [shape: bf16[512,512], index: 1, kind: input, shape index: {}]
  %s2 = inlined_call_operand.hbm [shape: bf16[512,512], index: 2, kind: input, shape index: {}]
  %s3 = inlined_call_operand.hbm [shape: bf16[512,512], index: 3, kind: input, shape index: {}]
  %s4 = inlined_call_operand.vmem [shape: f32[1,512], index: 4, kind: input, shape index: {}]
  %s5 = inlined_call_operand.hbm [shape: f32[8,512], index: 5, kind: output, shape index: {}]
  %s6 = sld [smem:[#allocation0]]
  $region46: #{tpu_custom_call.1} parent=0
    _
  %s8 = ssub.s32 1, %s6
  %s9 = scalar_select 0, %s8, %s6
  $region1: #{tpu_custom_call.1} parent=0
    #allocation2 [shape = 'u8[16384]{0}', space=vmem, size = 0x4000, scoped, tag = 'input window, operand 0, single buffered']
    #allocation3 [shape = 's32[1]{0}', space=sflag, size = 0x4, scoped, tag = 'scoped memory for tpu_custom_call.1']
    #allocation4 [shape = 's32[1]{0}', space=sflag, size = 0x4, scoped, tag = 'scoped memory for tpu_custom_call.1']
    #allocation5 [shape = 'u8[524288]{0}', space=vmem, size = 0x80000, scoped, tag = 'input window, operand 1, single buffered']
    #allocation6 [shape = 's32[1]{0}', space=sflag, size = 0x4, scoped, tag = 'scoped memory for tpu_custom_call.1']
    #allocation7 [shape = 'u8[524288]{0}', space=vmem, size = 0x80000, scoped, tag = 'input window, operand 2, single buffered']
    #allocation8 [shape = 'u8[524288]{0}', space=vmem, size = 0x80000, scoped, tag = 'input window, operand 3, single buffered']
    #allocation9 [shape = 's32[1]{0}', space=sflag, size = 0x4, scoped, tag = 'scoped memory for tpu_custom_call.1']
    #allocation10 [shape = 'u8[16384]{0}', space=vmem, size = 0x4000, scoped, tag = 'output window, operand 0, single buffered']
    %10 = vsyncpa [#allocation3], 0
    %11 = vsyncpa [#allocation6], 0
    %12 = vsyncpa [#allocation9], 0
    %13 = vsyncpa [#allocation4], 0
    // Predicated region
    $region2: #{tpu_custom_call.1} parent=1 // pred_check
      _
    $region3: #{tpu_custom_call.1} parent=1 // pred_check_branch
      %15 = sbr.rel (0) target = $region5
    $region4: #{tpu_custom_call.1} parent=1 // pred_region
      %s17 = ssub.s32 512, 512
      %18 = vsyncadd [#allocation3], %s17
      %s20 = sshll.u32 [#allocation2], 4
      %s21 = int_to_ptr.vmem [resolvable:$true] %s20
      %23 = dma.hbm_to_vmem [thread:$0]  %s0, 512, %s21, [#allocation3]
    $region5: #{tpu_custom_call.1} parent=1 // pred_fallthru
      _
    // Predicated region
    $region6: #{tpu_custom_call.1} parent=1 // pred_check
      _
    $region7: #{tpu_custom_call.1} parent=1 // pred_check_branch
      %25 = sbr.rel (0) target = $region9
    $region8: #{tpu_custom_call.1} parent=1 // pred_region
      %s27 = ssub.s32 16384, 16384
      %28 = vsyncadd [#allocation6], %s27
      %s29 = sshll.u32 [#allocation5], 4
      %s30 = int_to_ptr.vmem [resolvable:$true] %s29
      %35 = dma.hbm_to_vmem [thread:$0]  %s1, 16384, %s30, [#allocation6], 256, 256, 16
    $region9: #{tpu_custom_call.1} parent=1 // pred_fallthru
      _
    // Predicated region
    $region10: #{tpu_custom_call.1} parent=1 // pred_check
      _
    $region11: #{tpu_custom_call.1} parent=1 // pred_check_branch
      %37 = sbr.rel (0) target = $region13
    $region12: #{tpu_custom_call.1} parent=1 // pred_region
      %s39 = ssub.s32 16384, 16384
      %40 = vsyncadd [#allocation6], %s39
      %s41 = sshll.u32 [#allocation7], 4
      %s42 = int_to_ptr.vmem [resolvable:$true] %s41
      %47 = dma.hbm_to_vmem [thread:$0]  %s2, 16384, %s42, [#allocation6], 256, 256, 16
    $region13: #{tpu_custom_call.1} parent=1 // pred_fallthru
      _
    // Predicated region
    $region14: #{tpu_custom_call.1} parent=1 // pred_check
      _
    $region15: #{tpu_custom_call.1} parent=1 // pred_check_branch
      %49 = sbr.rel (0) target = $region17
    $region16: #{tpu_custom_call.1} parent=1 // pred_region
      %s51 = ssub.s32 16384, 16384
      %52 = vsyncadd [#allocation9], %s51
      %s53 = sshll.u32 [#allocation8], 4
      %s54 = int_to_ptr.vmem [resolvable:$true] %s53
      %59 = dma.hbm_to_vmem [thread:$0]  %s3, 16384, %s54, [#allocation9], 256, 256, 16
    $region17: #{tpu_custom_call.1} parent=1 // pred_fallthru
      _
    // Predicated region
    $region18: #{tpu_custom_call.1} parent=1 // pred_check
      _
    $region19: #{tpu_custom_call.1} parent=1 // pred_check_branch
      %61 = sbr.rel (0) target = $region21
    $region20: #{tpu_custom_call.1} parent=1 // pred_region
      _
    $region21: #{tpu_custom_call.1} parent=1 // pred_fallthru
      _
    // Predicated region
    $region22: #{tpu_custom_call.1} parent=1 // pred_check
      _
    $region23: #{tpu_custom_call.1} parent=1 // pred_check_branch
      %63 = sbr.rel (0) target = $region25
    $region24: #{tpu_custom_call.1} parent=1 // pred_region
      %64 = dma.done [#allocation3], 512
    $region25: #{tpu_custom_call.1} parent=1 // pred_fallthru
      _
    // Predicated region
    $region26: #{tpu_custom_call.1} parent=1 // pred_check
      _
    $region27: #{tpu_custom_call.1} parent=1 // pred_check_branch
      %66 = sbr.rel (0) target = $region29
    $region28: #{tpu_custom_call.1} parent=1 // pred_region
      %67 = dma.done [#allocation6], 16384
    $region29: #{tpu_custom_call.1} parent=1 // pred_fallthru
      _
    // Predicated region
    $region30: #{tpu_custom_call.1} parent=1 // pred_check
      _
    $region31: #{tpu_custom_call.1} parent=1 // pred_check_branch
      %69 = sbr.rel (0) target = $region33
    $region32: #{tpu_custom_call.1} parent=1 // pred_region
      %70 = dma.done [#allocation6], 16384
    $region33: #{tpu_custom_call.1} parent=1 // pred_fallthru
      _
    // Predicated region
    $region34: #{tpu_custom_call.1} parent=1 // pred_check
      _
    $region35: #{tpu_custom_call.1} parent=1 // pred_check_branch
      %72 = sbr.rel (0) target = $region37
    $region36: #{tpu_custom_call.1} parent=1 // pred_region
      %73 = dma.done [#allocation9], 16384
    $region37: #{tpu_custom_call.1} parent=1 // pred_fallthru
      _
    %v74 = vld [vmem:[%s4] sm:$0xf]
    %v75 = vld [vmem:[#allocation2] sm:$0xff]
    %v76 = vld [vmem:[#allocation2 + $0x8] sm:$0xff]
    %v77 = vld [vmem:[#allocation2 + $0x10] sm:$0xff]
    %v78 = vld [vmem:[#allocation2 + $0x18] sm:$0xff]
    %v79 = vpack.c.bf16 %v75, %v75
    %v80 = vpack.c.bf16 %v76, %v76
    %v81 = vpack.c.bf16 %v77, %v77
    %v82 = vpack.c.bf16 %v78, %v78
    %v83 = vld [vmem:[#allocation5] sm:$0xff]
    %v84 = vld [vmem:[#allocation5 + $0x8] sm:$0xff]
    %v85 = vld [vmem:[#allocation5 + $0x10] sm:$0xff]
    %v86 = vld [vmem:[#allocation5 + $0x18] sm:$0xff]
    %v87 = vld [vmem:[#allocation5 + $0x20] sm:$0xff]
    %v88 = vld [vmem:[#allocation5 + $0x28] sm:$0xff]
    %v89 = vld [vmem:[#allocation5 + $0x30] sm:$0xff]
    %v90 = vld [vmem:[#allocation5 + $0x38] sm:$0xff]
    %v91 = vld [vmem:[#allocation5 + $0x40] sm:$0xff]
    %v92 = vld [vmem:[#allocation5 + $0x48] sm:$0xff]
    %v93 = vld [vmem:[#allocation5 + $0x50] sm:$0xff]
    %v94 = vld [vmem:[#allocation5 + $0x58] sm:$0xff]
    %v95 = vld [vmem:[#allocation5 + $0x60] sm:$0xff]
    %v96 = vld [vmem:[#allocation5 + $0x68] sm:$0xff]
    %v97 = vld [vmem:[#allocation5 + $0x70] sm:$0xff]
    %v98 = vld [vmem:[#allocation5 + $0x78] sm:$0xff]
    %v99 = vld [vmem:[#allocation5 + $0x80] sm:$0xff]
    %v100 = vld [vmem:[#allocation5 + $0x88] sm:$0xff]
    %v101 = vld [vmem:[#allocation5 + $0x90] sm:$0xff]
    %v102 = vld [vmem:[#allocation5 + $0x98] sm:$0xff]
    %v103 = vld [vmem:[#allocation5 + $0xa0] sm:$0xff]
    %v104 = vld [vmem:[#allocation5 + $0xa8] sm:$0xff]
    %v105 = vld [vmem:[#allocation5 + $0xb0] sm:$0xff]
    %v106 = vld [vmem:[#allocation5 + $0xb8] sm:$0xff]
    %v107 = vld [vmem:[#allocation5 + $0xc0] sm:$0xff]
    %v108 = vld [vmem:[#allocation5 + $0xc8] sm:$0xff]
    %v109 = vld [vmem:[#allocation5 + $0xd0] sm:$0xff]
    %v110 = vld [vmem:[#allocation5 + $0xd8] sm:$0xff]
    %v111 = vld [vmem:[#allocation5 + $0xe0] sm:$0xff]
    %v112 = vld [vmem:[#allocation5 + $0xe8] sm:$0xff]
    %v113 = vld [vmem:[#allocation5 + $0xf0] sm:$0xff]
    %v114 = vld [vmem:[#allocation5 + $0xf8] sm:$0xff]
    %v115 = vld [vmem:[#allocation5 + $0x100] sm:$0xff]
    %v116 = vld [vmem:[#allocation5 + $0x108] sm:$0xff]
    %v117 = vld [vmem:[#allocation5 + $0x110] sm:$0xff]
    %v118 = vld [vmem:[#allocation5 + $0x118] sm:$0xff]
    %v119 = vld [vmem:[#allocation5 + $0x120] sm:$0xff]
    %v120 = vld [vmem:[#allocation5 + $0x128] sm:$0xff]
    %v121 = vld [vmem:[#allocation5 + $0x130] sm:$0xff]
    %v122 = vld [vmem:[#allocation5 + $0x138] sm:$0xff]
    %v123 = vld [vmem:[#allocation5 + $0x140] sm:$0xff]
    %v124 = vld [vmem:[#allocation5 + $0x148] sm:$0xff]
    %v125 = vld [vmem:[#allocation5 + $0x150] sm:$0xff]
    %v126 = vld [vmem:[#allocation5 + $0x158] sm:$0xff]
    %v127 = vld [vmem:[#allocation5 + $0x160] sm:$0xff]
    %v128 = vld [vmem:[#allocation5 + $0x168] sm:$0xff]
    %v129 = vld [vmem:[#allocation5 + $0x170] sm:$0xff]
    %v130 = vld [vmem:[#allocation5 + $0x178] sm:$0xff]
    %v131 = vld [vmem:[#allocation5 + $0x180] sm:$0xff]
    %v132 = vld [vmem:[#allocation5 + $0x188] sm:$0xff]
    %v133 = vld [vmem:[#allocation5 + $0x190] sm:$0xff]
    %v134 = vld [vmem:[#allocation5 + $0x198] sm:$0xff]
    %v135 = vld [vmem:[#allocation5 + $0x1a0] sm:$0xff]
    %v136 = vld [vmem:[#allocation5 + $0x1a8] sm:$0xff]
    %v137 = vld [vmem:[#allocation5 + $0x1b0] sm:$0xff]
    %v138 = vld [vmem:[#allocation5 + $0x1b8] sm:$0xff]
    %v139 = vld [vmem:[#allocation5 + $0x1c0] sm:$0xff]
    %v140 = vld [vmem:[#allocation5 + $0x1c8] sm:$0xff]
    %v141 = vld [vmem:[#allocation5 + $0x1d0] sm:$0xff]
    %v142 = vld [vmem:[#allocation5 + $0x1d8] sm:$0xff]
    %v143 = vld [vmem:[#allocation5 + $0x1e0] sm:$0xff]
    %v144 = vld [vmem:[#allocation5 + $0x1e8] sm:$0xff]
    %v145 = vld [vmem:[#allocation5 + $0x1f0] sm:$0xff]
    %v146 = vld [vmem:[#allocation5 + $0x1f8] sm:$0xff]
    %v147 = vld [vmem:[#allocation5 + $0x200] sm:$0xff]
    %v148 = vld [vmem:[#allocation5 + $0x208] sm:$0xff]
    %v149 = vld [vmem:[#allocation5 + $0x210] sm:$0xff]
    %v150 = vld [vmem:[#allocation5 + $0x218] sm:$0xff]
    %v151 = vld [vmem:[#allocation5 + $0x220] sm:$0xff]
    %v152 = vld [vmem:[#allocation5 + $0x228] sm:$0xff]
    %v153 = vld [vmem:[#allocation5 + $0x230] sm:$0xff]
    %v154 = vld [vmem:[#allocation5 + $0x238] sm:$0xff]
    %v155 = vld [vmem:[#allocation5 + $0x240] sm:$0xff]
    %v156 = vld [vmem:[#allocation5 + $0x248] sm:$0xff]
    %v157 = vld [vmem:[#allocation5 + $0x250] sm:$0xff]
    %v158 = vld [vmem:[#allocation5 + $0x258] sm:$0xff]
    %v159 = vld [vmem:[#allocation5 + $0x260] sm:$0xff]
    %v160 = vld [vmem:[#allocation5 + $0x268] sm:$0xff]
    %v161 = vld [vmem:[#allocation5 + $0x270] sm:$0xff]
    %v162 = vld [vmem:[#allocation5 + $0x278] sm:$0xff]
    %v163 = vld [vmem:[#allocation5 + $0x280] sm:$0xff]
    %v164 = vld [vmem:[#allocation5 + $0x288] sm:$0xff]
    %v165 = vld [vmem:[#allocation5 + $0x290] sm:$0xff]
    %v166 = vld [vmem:[#allocation5 + $0x298] sm:$0xff]
    %v167 = vld [vmem:[#allocation5 + $0x2a0] sm:$0xff]
    %v168 = vld [vmem:[#allocation5 + $0x2a8] sm:$0xff]
    %v169 = vld [vmem:[#allocation5 + $0x2b0] sm:$0xff]
    %v170 = vld [vmem:[#allocation5 + $0x2b8] sm:$0xff]
    %v171 = vld [vmem:[#allocation5 + $0x2c0] sm:$0xff]
    %v172 = vld [vmem:[#allocation5 + $0x2c8] sm:$0xff]
    %v173 = vld [vmem:[#allocation5 + $0x2d0] sm:$0xff]
    %v174 = vld [vmem:[#allocation5 + $0x2d8] sm:$0xff]
    %v175 = vld [vmem:[#allocation5 + $0x2e0] sm:$0xff]
    %v176 = vld [vmem:[#allocation5 + $0x2e8] sm:$0xff]
    %v177 = vld [vmem:[#allocation5 + $0x2f0] sm:$0xff]
    %v178 = vld [vmem:[#allocation5 + $0x2f8] sm:$0xff]
    %v179 = vld [vmem:[#allocation5 + $0x300] sm:$0xff]
    %v180 = vld [vmem:[#allocation5 + $0x308] sm:$0xff]
    %v181 = vld [vmem:[#allocation5 + $0x310] sm:$0xff]
    %v182 = vld [vmem:[#allocation5 + $0x318] sm:$0xff]
    %v183 = vld [vmem:[#allocation5 + $0x320] sm:$0xff]
    %v184 = vld [vmem:[#allocation5 + $0x328] sm:$0xff]
    %v185 = vld [vmem:[#allocation5 + $0x330] sm:$0xff]
    %v186 = vld [vmem:[#allocation5 + $0x338] sm:$0xff]
    %v187 = vld [vmem:[#allocation5 + $0x340] sm:$0xff]
    %v188 = vld [vmem:[#allocation5 + $0x348] sm:$0xff]
    %v189 = vld [vmem:[#allocation5 + $0x350] sm:$0xff]
    %v190 = vld [vmem:[#allocation5 + $0x358] sm:$0xff]
    %v191 = vld [vmem:[#allocation5 + $0x360] sm:$0xff]
    %v192 = vld [vmem:[#allocation5 + $0x368] sm:$0xff]
    %v193 = vld [vmem:[#allocation5 + $0x370] sm:$0xff]
    %v194 = vld [vmem:[#allocation5 + $0x378] sm:$0xff]
    %v195 = vld [vmem:[#allocation5 + $0x380] sm:$0xff]
    %v196 = vld [vmem:[#allocation5 + $0x388] sm:$0xff]
    %v197 = vld [vmem:[#allocation5 + $0x390] sm:$0xff]
    %v198 = vld [vmem:[#allocation5 + $0x398] sm:$0xff]
    %v199 = vld [vmem:[#allocation5 + $0x3a0] sm:$0xff]
    %v200 = vld [vmem:[#allocation5 + $0x3a8] sm:$0xff]
    %v201 = vld [vmem:[#allocation5 + $0x3b0] sm:$0xff]
    %v202 = vld [vmem:[#allocation5 + $0x3b8] sm:$0xff]
    %v203 = vld [vmem:[#allocation5 + $0x3c0] sm:$0xff]
    %v204 = vld [vmem:[#allocation5 + $0x3c8] sm:$0xff]
    %v205 = vld [vmem:[#allocation5 + $0x3d0] sm:$0xff]
    %v206 = vld [vmem:[#allocation5 + $0x3d8] sm:$0xff]
    %v207 = vld [vmem:[#allocation5 + $0x3e0] sm:$0xff]
    %v208 = vld [vmem:[#allocation5 + $0x3e8] sm:$0xff]
    %v209 = vld [vmem:[#allocation5 + $0x3f0] sm:$0xff]
    %v210 = vld [vmem:[#allocation5 + $0x3f8] sm:$0xff]
    %v339 = vunpack.c.l.b16 %v83
    %v340 = vunpack.c.h.b16 %v83
    %v341 = vunpack.c.l.b16 %v84
    %v342 = vunpack.c.h.b16 %v84
    %v343 = vunpack.c.l.b16 %v85
    %v344 = vunpack.c.h.b16 %v85
    %v345 = vunpack.c.l.b16 %v86
    %v346 = vunpack.c.h.b16 %v86
    %v347 = vunpack.c.l.b16 %v87
    %v348 = vunpack.c.h.b16 %v87
    %v349 = vunpack.c.l.b16 %v88
    %v350 = vunpack.c.h.b16 %v88
    %v351 = vunpack.c.l.b16 %v89
    %v352 = vunpack.c.h.b16 %v89
    %v353 = vunpack.c.l.b16 %v90
    %v354 = vunpack.c.h.b16 %v90
    %v355 = vunpack.c.l.b16 %v91
    %v356 = vunpack.c.h.b16 %v91
    %v357 = vunpack.c.l.b16 %v92
    %v358 = vunpack.c.h.b16 %v92
    %v359 = vunpack.c.l.b16 %v93
    %v360 = vunpack.c.h.b16 %v93
    %v361 = vunpack.c.l.b16 %v94
    %v362 = vunpack.c.h.b16 %v94
    %v363 = vunpack.c.l.b16 %v95
    %v364 = vunpack.c.h.b16 %v95
    %v365 = vunpack.c.l.b16 %v96
    %v366 = vunpack.c.h.b16 %v96
    %v367 = vunpack.c.l.b16 %v97
    %v368 = vunpack.c.h.b16 %v97
    %v369 = vunpack.c.l.b16 %v98
    %v370 = vunpack.c.h.b16 %v98
    %v371 = vunpack.c.l.b16 %v99
    %v372 = vunpack.c.h.b16 %v99
    %v373 = vunpack.c.l.b16 %v100
    %v374 = vunpack.c.h.b16 %v100
    %v375 = vunpack.c.l.b16 %v101
    %v376 = vunpack.c.h.b16 %v101
    %v377 = vunpack.c.l.b16 %v102
    %v378 = vunpack.c.h.b16 %v102
    %v379 = vunpack.c.l.b16 %v103
    %v380 = vunpack.c.h.b16 %v103
    %v381 = vunpack.c.l.b16 %v104
    %v382 = vunpack.c.h.b16 %v104
    %v383 = vunpack.c.l.b16 %v105
    %v384 = vunpack.c.h.b16 %v105
    %v385 = vunpack.c.l.b16 %v106
    %v386 = vunpack.c.h.b16 %v106
    %v387 = vunpack.c.l.b16 %v107
    %v388 = vunpack.c.h.b16 %v107
    %v389 = vunpack.c.l.b16 %v108
    %v390 = vunpack.c.h.b16 %v108
    %v391 = vunpack.c.l.b16 %v109
    %v392 = vunpack.c.h.b16 %v109
    %v393 = vunpack.c.l.b16 %v110
    %v394 = vunpack.c.h.b16 %v110
    %v395 = vunpack.c.l.b16 %v111
    %v396 = vunpack.c.h.b16 %v111
    %v397 = vunpack.c.l.b16 %v112
    %v398 = vunpack.c.h.b16 %v112
    %v399 = vunpack.c.l.b16 %v113
    %v400 = vunpack.c.h.b16 %v113
    %v401 = vunpack.c.l.b16 %v114
    %v402 = vunpack.c.h.b16 %v114
    %v403 = vunpack.c.l.b16 %v115
    %v404 = vunpack.c.h.b16 %v115
    %v405 = vunpack.c.l.b16 %v116
    %v406 = vunpack.c.h.b16 %v116
    %v407 = vunpack.c.l.b16 %v117
    %v408 = vunpack.c.h.b16 %v117
    %v409 = vunpack.c.l.b16 %v118
    %v410 = vunpack.c.h.b16 %v118
    %v411 = vunpack.c.l.b16 %v119
    %v412 = vunpack.c.h.b16 %v119
    %v413 = vunpack.c.l.b16 %v120
    %v414 = vunpack.c.h.b16 %v120
    %v415 = vunpack.c.l.b16 %v121
    %v416 = vunpack.c.h.b16 %v121
    %v417 = vunpack.c.l.b16 %v122
    %v418 = vunpack.c.h.b16 %v122
    %v419 = vunpack.c.l.b16 %v123
    %v420 = vunpack.c.h.b16 %v123
    %v421 = vunpack.c.l.b16 %v124
    %v422 = vunpack.c.h.b16 %v124
    %v423 = vunpack.c.l.b16 %v125
    %v424 = vunpack.c.h.b16 %v125
    %v425 = vunpack.c.l.b16 %v126
    %v426 = vunpack.c.h.b16 %v126
    %v427 = vunpack.c.l.b16 %v127
    %v428 = vunpack.c.h.b16 %v127
    %v429 = vunpack.c.l.b16 %v128
    %v430 = vunpack.c.h.b16 %v128
    %v431 = vunpack.c.l.b16 %v129
    %v432 = vunpack.c.h.b16 %v129
    %v433 = vunpack.c.l.b16 %v130
    %v434 = vunpack.c.h.b16 %v130
    %v435 = vunpack.c.l.b16 %v131
    %v436 = vunpack.c.h.b16 %v131
    %v437 = vunpack.c.l.b16 %v132
    %v438 = vunpack.c.h.b16 %v132
    %v439 = vunpack.c.l.b16 %v133
    %v440 = vunpack.c.h.b16 %v133
    %v441 = vunpack.c.l.b16 %v134
    %v442 = vunpack.c.h.b16 %v134
    %v443 = vunpack.c.l.b16 %v135
    %v444 = vunpack.c.h.b16 %v135
    %v445 = vunpack.c.l.b16 %v136
    %v446 = vunpack.c.h.b16 %v136
    %v447 = vunpack.c.l.b16 %v137
    %v448 = vunpack.c.h.b16 %v137
    %v449 = vunpack.c.l.b16 %v138
    %v450 = vunpack.c.h.b16 %v138
    %v451 = vunpack.c.l.b16 %v139
    %v452 = vunpack.c.h.b16 %v139
    %v453 = vunpack.c.l.b16 %v140
    %v454 = vunpack.c.h.b16 %v140
    %v455 = vunpack.c.l.b16 %v141
    %v456 = vunpack.c.h.b16 %v141
    %v457 = vunpack.c.l.b16 %v142
    %v458 = vunpack.c.h.b16 %v142
    %v459 = vunpack.c.l.b16 %v143
    %v460 = vunpack.c.h.b16 %v143
    %v461 = vunpack.c.l.b16 %v144
    %v462 = vunpack.c.h.b16 %v144
    %v463 = vunpack.c.l.b16 %v145
    %v464 = vunpack.c.h.b16 %v145
    %v465 = vunpack.c.l.b16 %v146
    %v466 = vunpack.c.h.b16 %v146
    %v467 = vunpack.c.l.b16 %v147
    %v468 = vunpack.c.h.b16 %v147
    %v469 = vunpack.c.l.b16 %v148
    %v470 = vunpack.c.h.b16 %v148
    %v471 = vunpack.c.l.b16 %v149
    %v472 = vunpack.c.h.b16 %v149
    %v473 = vunpack.c.l.b16 %v150
    %v474 = vunpack.c.h.b16 %v150
    %v475 = vunpack.c.l.b16 %v151
    %v476 = vunpack.c.h.b16 %v151
    %v477 = vunpack.c.l.b16 %v152
    %v478 = vunpack.c.h.b16 %v152
    %v479 = vunpack.c.l.b16 %v153
    %v480 = vunpack.c.h.b16 %v153
    %v481 = vunpack.c.l.b16 %v154
    %v482 = vunpack.c.h.b16 %v154
    %v483 = vunpack.c.l.b16 %v155
    %v484 = vunpack.c.h.b16 %v155
    %v485 = vunpack.c.l.b16 %v156
    %v486 = vunpack.c.h.b16 %v156
    %v487 = vunpack.c.l.b16 %v157
    %v488 = vunpack.c.h.b16 %v157
    %v489 = vunpack.c.l.b16 %v158
    %v490 = vunpack.c.h.b16 %v158
    %v491 = vunpack.c.l.b16 %v159
    %v492 = vunpack.c.h.b16 %v159
    %v493 = vunpack.c.l.b16 %v160
    %v494 = vunpack.c.h.b16 %v160
    %v495 = vunpack.c.l.b16 %v161
    %v496 = vunpack.c.h.b16 %v161
    %v497 = vunpack.c.l.b16 %v162
    %v498 = vunpack.c.h.b16 %v162
    %v499 = vunpack.c.l.b16 %v163
    %v500 = vunpack.c.h.b16 %v163
    %v501 = vunpack.c.l.b16 %v164
    %v502 = vunpack.c.h.b16 %v164
    %v503 = vunpack.c.l.b16 %v165
    %v504 = vunpack.c.h.b16 %v165
    %v505 = vunpack.c.l.b16 %v166
    %v506 = vunpack.c.h.b16 %v166
    %v507 = vunpack.c.l.b16 %v167
    %v508 = vunpack.c.h.b16 %v167
    %v509 = vunpack.c.l.b16 %v168
    %v510 = vunpack.c.h.b16 %v168
    %v511 = vunpack.c.l.b16 %v169
    %v512 = vunpack.c.h.b16 %v169
    %v513 = vunpack.c.l.b16 %v170
    %v514 = vunpack.c.h.b16 %v170
    %v515 = vunpack.c.l.b16 %v171
    %v516 = vunpack.c.h.b16 %v171
    %v517 = vunpack.c.l.b16 %v172
    %v518 = vunpack.c.h.b16 %v172
    %v519 = vunpack.c.l.b16 %v173
    %v520 = vunpack.c.h.b16 %v173
    %v521 = vunpack.c.l.b16 %v174
    %v522 = vunpack.c.h.b16 %v174
    %v523 = vunpack.c.l.b16 %v175
    %v524 = vunpack.c.h.b16 %v175
    %v525 = vunpack.c.l.b16 %v176
    %v526 = vunpack.c.h.b16 %v176
    %v527 = vunpack.c.l.b16 %v177
    %v528 = vunpack.c.h.b16 %v177
    %v529 = vunpack.c.l.b16 %v178
    %v530 = vunpack.c.h.b16 %v178
    %v531 = vunpack.c.l.b16 %v179
    %v532 = vunpack.c.h.b16 %v179
    %v533 = vunpack.c.l.b16 %v180
    %v534 = vunpack.c.h.b16 %v180
    %v535 = vunpack.c.l.b16 %v181
    %v536 = vunpack.c.h.b16 %v181
    %v537 = vunpack.c.l.b16 %v182
    %v538 = vunpack.c.h.b16 %v182
    %v539 = vunpack.c.l.b16 %v183
    %v540 = vunpack.c.h.b16 %v183
    %v541 = vunpack.c.l.b16 %v184
    %v542 = vunpack.c.h.b16 %v184
    %v543 = vunpack.c.l.b16 %v185
    %v544 = vunpack.c.h.b16 %v185
    %v545 = vunpack.c.l.b16 %v186
    %v546 = vunpack.c.h.b16 %v186
    %v547 = vunpack.c.l.b16 %v187
    %v548 = vunpack.c.h.b16 %v187
    %v549 = vunpack.c.l.b16 %v188
    %v550 = vunpack.c.h.b16 %v188
    %v551 = vunpack.c.l.b16 %v189
    %v552 = vunpack.c.h.b16 %v189
    %v553 = vunpack.c.l.b16 %v190
    %v554 = vunpack.c.h.b16 %v190
    %v555 = vunpack.c.l.b16 %v191
    %v556 = vunpack.c.h.b16 %v191
    %v557 = vunpack.c.l.b16 %v192
    %v558 = vunpack.c.h.b16 %v192
    %v559 = vunpack.c.l.b16 %v193
    %v560 = vunpack.c.h.b16 %v193
    %v561 = vunpack.c.l.b16 %v194
    %v562 = vunpack.c.h.b16 %v194
    %v563 = vunpack.c.l.b16 %v195
    %v564 = vunpack.c.h.b16 %v195
    %v565 = vunpack.c.l.b16 %v196
    %v566 = vunpack.c.h.b16 %v196
    %v567 = vunpack.c.l.b16 %v197
    %v568 = vunpack.c.h.b16 %v197
    %v569 = vunpack.c.l.b16 %v198
    %v570 = vunpack.c.h.b16 %v198
    %v571 = vunpack.c.l.b16 %v199
    %v572 = vunpack.c.h.b16 %v199
    %v573 = vunpack.c.l.b16 %v200
    %v574 = vunpack.c.h.b16 %v200
    %v575 = vunpack.c.l.b16 %v201
    %v576 = vunpack.c.h.b16 %v201
    %v577 = vunpack.c.l.b16 %v202
    %v578 = vunpack.c.h.b16 %v202
    %v579 = vunpack.c.l.b16 %v203
    %v580 = vunpack.c.h.b16 %v203
    %v581 = vunpack.c.l.b16 %v204
    %v582 = vunpack.c.h.b16 %v204
    %v583 = vunpack.c.l.b16 %v205
    %v584 = vunpack.c.h.b16 %v205
    %v585 = vunpack.c.l.b16 %v206
    %v586 = vunpack.c.h.b16 %v206
    %v587 = vunpack.c.l.b16 %v207
    %v588 = vunpack.c.h.b16 %v207
    %v589 = vunpack.c.l.b16 %v208
    %v590 = vunpack.c.h.b16 %v208
    %v591 = vunpack.c.l.b16 %v209
    %v592 = vunpack.c.h.b16 %v209
    %v593 = vunpack.c.l.b16 %v210
    %v594 = vunpack.c.h.b16 %v210
    %v595 = vpack.c.b16 %v343, %v339
    %v596 = vpack.c.b16 %v344, %v340
    %v597 = vpack.c.b16 %v345, %v341
    %v598 = vpack.c.b16 %v346, %v342
    %v599 = vpack.c.b16 %v351, %v347
    %v600 = vpack.c.b16 %v352, %v348
    %v601 = vpack.c.b16 %v353, %v349
    %v602 = vpack.c.b16 %v354, %v350
    %v603 = vpack.c.b16 %v359, %v355
    %v604 = vpack.c.b16 %v360, %v356
    %v605 = vpack.c.b16 %v361, %v357
    %v606 = vpack.c.b16 %v362, %v358
    %v607 = vpack.c.b16 %v367, %v363
    %v608 = vpack.c.b16 %v368, %v364
    %v609 = vpack.c.b16 %v369, %v365
    %v610 = vpack.c.b16 %v370, %v366
    %v611 = vpack.c.b16 %v375, %v371
    %v612 = vpack.c.b16 %v376, %v372
    %v613 = vpack.c.b16 %v377, %v373
    %v614 = vpack.c.b16 %v378, %v374
    %v615 = vpack.c.b16 %v383, %v379
    %v616 = vpack.c.b16 %v384, %v380
    %v617 = vpack.c.b16 %v385, %v381
    %v618 = vpack.c.b16 %v386, %v382
    %v619 = vpack.c.b16 %v391, %v387
    %v620 = vpack.c.b16 %v392, %v388
    %v621 = vpack.c.b16 %v393, %v389
    %v622 = vpack.c.b16 %v394, %v390
    %v623 = vpack.c.b16 %v399, %v395
    %v624 = vpack.c.b16 %v400, %v396
    %v625 = vpack.c.b16 %v401, %v397
    %v626 = vpack.c.b16 %v402, %v398
    %v627 = vpack.c.b16 %v407, %v403
    %v628 = vpack.c.b16 %v408, %v404
    %v629 = vpack.c.b16 %v409, %v405
    %v630 = vpack.c.b16 %v410, %v406
    %v631 = vpack.c.b16 %v415, %v411
    %v632 = vpack.c.b16 %v416, %v412
    %v633 = vpack.c.b16 %v417, %v413
    %v634 = vpack.c.b16 %v418, %v414
    %v635 = vpack.c.b16 %v423, %v419
    %v636 = vpack.c.b16 %v424, %v420
    %v637 = vpack.c.b16 %v425, %v421
    %v638 = vpack.c.b16 %v426, %v422
    %v639 = vpack.c.b16 %v431, %v427
    %v640 = vpack.c.b16 %v432, %v428
    %v641 = vpack.c.b16 %v433, %v429
    %v642 = vpack.c.b16 %v434, %v430
    %v643 = vpack.c.b16 %v439, %v435
    %v644 = vpack.c.b16 %v440, %v436
    %v645 = vpack.c.b16 %v441, %v437
    %v646 = vpack.c.b16 %v442, %v438
    %v647 = vpack.c.b16 %v447, %v443
    %v648 = vpack.c.b16 %v448, %v444
    %v649 = vpack.c.b16 %v449, %v445
    %v650 = vpack.c.b16 %v450, %v446
    %v651 = vpack.c.b16 %v455, %v451
    %v652 = vpack.c.b16 %v456, %v452
    %v653 = vpack.c.b16 %v457, %v453
    %v654 = vpack.c.b16 %v458, %v454
    %v655 = vpack.c.b16 %v463, %v459
    %v656 = vpack.c.b16 %v464, %v460
    %v657 = vpack.c.b16 %v465, %v461
    %v658 = vpack.c.b16 %v466, %v462
    %v659 = vpack.c.b16 %v471, %v467
    %v660 = vpack.c.b16 %v472, %v468
    %v661 = vpack.c.b16 %v473, %v469
    %v662 = vpack.c.b16 %v474, %v470
    %v663 = vpack.c.b16 %v479, %v475
    %v664 = vpack.c.b16 %v480, %v476
    %v665 = vpack.c.b16 %v481, %v477
    %v666 = vpack.c.b16 %v482, %v478
    %v667 = vpack.c.b16 %v487, %v483
    %v668 = vpack.c.b16 %v488, %v484
    %v669 = vpack.c.b16 %v489, %v485
    %v670 = vpack.c.b16 %v490, %v486
    %v671 = vpack.c.b16 %v495, %v491
    %v672 = vpack.c.b16 %v496, %v492
    %v673 = vpack.c.b16 %v497, %v493
    %v674 = vpack.c.b16 %v498, %v494
    %v675 = vpack.c.b16 %v503, %v499
    %v676 = vpack.c.b16 %v504, %v500
    %v677 = vpack.c.b16 %v505, %v501
    %v678 = vpack.c.b16 %v506, %v502
    %v679 = vpack.c.b16 %v511, %v507
    %v680 = vpack.c.b16 %v512, %v508
    %v681 = vpack.c.b16 %v513, %v509
    %v682 = vpack.c.b16 %v514, %v510
    %v683 = vpack.c.b16 %v519, %v515
    %v684 = vpack.c.b16 %v520, %v516
    %v685 = vpack.c.b16 %v521, %v517
    %v686 = vpack.c.b16 %v522, %v518
    %v687 = vpack.c.b16 %v527, %v523
    %v688 = vpack.c.b16 %v528, %v524
    %v689 = vpack.c.b16 %v529, %v525
    %v690 = vpack.c.b16 %v530, %v526
    %v691 = vpack.c.b16 %v535, %v531
    %v692 = vpack.c.b16 %v536, %v532
    %v693 = vpack.c.b16 %v537, %v533
    %v694 = vpack.c.b16 %v538, %v534
    %v695 = vpack.c.b16 %v543, %v539
    %v696 = vpack.c.b16 %v544, %v540
    %v697 = vpack.c.b16 %v545, %v541
    %v698 = vpack.c.b16 %v546, %v542
    %v699 = vpack.c.b16 %v551, %v547
    %v700 = vpack.c.b16 %v552, %v548
    %v701 = vpack.c.b16 %v553, %v549
    %v702 = vpack.c.b16 %v554, %v550
    %v703 = vpack.c.b16 %v559, %v555
    %v704 = vpack.c.b16 %v560, %v556
    %v705 = vpack.c.b16 %v561, %v557
    %v706 = vpack.c.b16 %v562, %v558
    %v707 = vpack.c.b16 %v567, %v563
    %v708 = vpack.c.b16 %v568, %v564
    %v709 = vpack.c.b16 %v569, %v565
    %v710 = vpack.c.b16 %v570, %v566
    %v711 = vpack.c.b16 %v575, %v571
    %v712 = vpack.c.b16 %v576, %v572
    %v713 = vpack.c.b16 %v577, %v573
    %v714 = vpack.c.b16 %v578, %v574
    %v715 = vpack.c.b16 %v583, %v579
    %v716 = vpack.c.b16 %v584, %v580
    %v717 = vpack.c.b16 %v585, %v581
    %v718 = vpack.c.b16 %v586, %v582
    %v719 = vpack.c.b16 %v591, %v587
    %v720 = vpack.c.b16 %v592, %v588
    %v721 = vpack.c.b16 %v593, %v589
    %v722 = vpack.c.b16 %v594, %v590
    %851 = vmatprep.subr.bf16.mxu0 %v596
    %852 = vmatpush1.bf16.msra.mxu0 %v595
    %853 = vmatprep.subr.bf16.mxu0 %v600
    %854 = vmatpush1.bf16.msra.mxu0 %v599
    %855 = vmatprep.subr.bf16.mxu0 %v604
    %856 = vmatpush1.bf16.msra.mxu0 %v603
    %857 = vmatprep.subr.bf16.mxu0 %v608
    %858 = vmatpush1.bf16.msra.mxu0 %v607
    %859 = vmatprep.subr.bf16.mxu0 %v612
    %860 = vmatpush1.bf16.msra.mxu0 %v611
    %861 = vmatprep.subr.bf16.mxu0 %v616
    %862 = vmatpush1.bf16.msra.mxu0 %v615
    %863 = vmatprep.subr.bf16.mxu0 %v620
    %864 = vmatpush1.bf16.msra.mxu0 %v619
    %865 = vmatprep.subr.bf16.mxu0 %v624
    %866 = vmatpush1.bf16.msra.mxu0 %v623
    %867 = vmatprep.subr.bf16.mxu0 %v628
    %868 = vmatpush1.bf16.msra.mxu0 %v627
    %869 = vmatprep.subr.bf16.mxu0 %v632
    %870 = vmatpush1.bf16.msra.mxu0 %v631
    %871 = vmatprep.subr.bf16.mxu0 %v636
    %872 = vmatpush1.bf16.msra.mxu0 %v635
    %873 = vmatprep.subr.bf16.mxu0 %v640
    %874 = vmatpush1.bf16.msra.mxu0 %v639
    %875 = vmatprep.subr.bf16.mxu0 %v644
    %876 = vmatpush1.bf16.msra.mxu0 %v643
    %877 = vmatprep.subr.bf16.mxu0 %v648
    %878 = vmatpush1.bf16.msra.mxu0 %v647
    %879 = vmatprep.subr.bf16.mxu0 %v652
    %880 = vmatpush1.bf16.msra.mxu0 %v651
    %881 = vmatprep.subr.bf16.mxu0 %v656
    %882 = vmatpush1.bf16.msra.mxu0 %v655
    %883 = vmatprep.mubr.bf16.mxu0 %v80
    %884 = vmatmul.mubr.bf16.gmra.mrb[0].mxu0 %v79
    %v885 = vpop.f32.mrb[0].mxu0
    %v886 = vadd.f32 0.0, %v885
    %v887 = vpop.f32.mrb[0].mxu0
    %v888 = vadd.f32 0.0, %v887
    %v889 = vpop.f32.mrb[0].mxu0
    %v890 = vpop.f32.mrb[0].mxu0
    %891 = vdwg.mxu0
    %892 = vmatprep.subr.bf16.mxu0 %v660
    %893 = vmatpush1.bf16.msra.mxu0 %v659
    %894 = vmatprep.subr.bf16.mxu0 %v664
    %895 = vmatpush1.bf16.msra.mxu0 %v663
    %896 = vmatprep.subr.bf16.mxu0 %v668
    %897 = vmatpush1.bf16.msra.mxu0 %v667
    %898 = vmatprep.subr.bf16.mxu0 %v672
    %899 = vmatpush1.bf16.msra.mxu0 %v671
    %900 = vmatprep.subr.bf16.mxu0 %v676
    %901 = vmatpush1.bf16.msra.mxu0 %v675
    %902 = vmatprep.subr.bf16.mxu0 %v680
    %903 = vmatpush1.bf16.msra.mxu0 %v679
    %904 = vmatprep.subr.bf16.mxu0 %v684
    %905 = vmatpush1.bf16.msra.mxu0 %v683
    %906 = vmatprep.subr.bf16.mxu0 %v688
    %907 = vmatpush1.bf16.msra.mxu0 %v687
    %908 = vmatprep.subr.bf16.mxu0 %v692
    %909 = vmatpush1.bf16.msra.mxu0 %v691
    %910 = vmatprep.subr.bf16.mxu0 %v696
    %911 = vmatpush1.bf16.msra.mxu0 %v695
    %912 = vmatprep.subr.bf16.mxu0 %v700
    %913 = vmatpush1.bf16.msra.mxu0 %v699
    %914 = vmatprep.subr.bf16.mxu0 %v704
    %915 = vmatpush1.bf16.msra.mxu0 %v703
    %916 = vmatprep.subr.bf16.mxu0 %v708
    %917 = vmatpush1.bf16.msra.mxu0 %v707
    %918 = vmatprep.subr.bf16.mxu0 %v712
    %919 = vmatpush1.bf16.msra.mxu0 %v711
    %920 = vmatprep.subr.bf16.mxu0 %v716
    %921 = vmatpush1.bf16.msra.mxu0 %v715
    %922 = vmatprep.subr.bf16.mxu0 %v720
    %923 = vmatpush1.bf16.msra.mxu0 %v719
    %924 = vmatprep.mubr.bf16.mxu0 %v82
    %925 = vmatmul.mubr.bf16.gmra.mrb[0].mxu0 %v81
    %v926 = vpop.f32.mrb[0].mxu0
    %v927 = vadd.f32 %v886, %v926
    %v928 = vpop.f32.mrb[0].mxu0
    %v929 = vadd.f32 %v888, %v928
    %v930 = vpop.f32.mrb[0].mxu0
    %v931 = vpop.f32.mrb[0].mxu0
    %932 = vdwg.mxu0
    %933 = vmatprep.subr.bf16.mxu0 %v598
    %934 = vmatpush1.bf16.msra.mxu0 %v597
    %935 = vmatprep.subr.bf16.mxu0 %v602
    %936 = vmatpush1.bf16.msra.mxu0 %v601
    %937 = vmatprep.subr.bf16.mxu0 %v606
    %938 = vmatpush1.bf16.msra.mxu0 %v605
    %939 = vmatprep.subr.bf16.mxu0 %v610
    %940 = vmatpush1.bf16.msra.mxu0 %v609
    %941 = vmatprep.subr.bf16.mxu0 %v614
    %942 = vmatpush1.bf16.msra.mxu0 %v613
    %943 = vmatprep.subr.bf16.mxu0 %v618
    %944 = vmatpush1.bf16.msra.mxu0 %v617
    %945 = vmatprep.subr.bf16.mxu0 %v622
    %946 = vmatpush1.bf16.msra.mxu0 %v621
    %947 = vmatprep.subr.bf16.mxu0 %v626
    %948 = vmatpush1.bf16.msra.mxu0 %v625
    %949 = vmatprep.subr.bf16.mxu0 %v630
    %950 = vmatpush1.bf16.msra.mxu0 %v629
    %951 = vmatprep.subr.bf16.mxu0 %v634
    %952 = vmatpush1.bf16.msra.mxu0 %v633
    %953 = vmatprep.subr.bf16.mxu0 %v638
    %954 = vmatpush1.bf16.msra.mxu0 %v637
    %955 = vmatprep.subr.bf16.mxu0 %v642
    %956 = vmatpush1.bf16.msra.mxu0 %v641
    %957 = vmatprep.subr.bf16.mxu0 %v646
    %958 = vmatpush1.bf16.msra.mxu0 %v645
    %959 = vmatprep.subr.bf16.mxu0 %v650
    %960 = vmatpush1.bf16.msra.mxu0 %v649
    %961 = vmatprep.subr.bf16.mxu0 %v654
    %962 = vmatpush1.bf16.msra.mxu0 %v653
    %963 = vmatprep.subr.bf16.mxu0 %v658
    %964 = vmatpush1.bf16.msra.mxu0 %v657
    %965 = vmatprep.mubr.bf16.mxu0 %v80
    %966 = vmatmul.mubr.bf16.gmra.mrb[0].mxu0 %v79
    %v967 = vpop.f32.mrb[0].mxu0
    %v968 = vadd.f32 0.0, %v967
    %v969 = vpop.f32.mrb[0].mxu0
    %v970 = vadd.f32 0.0, %v969
    %v971 = vpop.f32.mrb[0].mxu0
    %v972 = vpop.f32.mrb[0].mxu0
    %973 = vdwg.mxu0
    %974 = vmatprep.subr.bf16.mxu0 %v662
    %975 = vmatpush1.bf16.msra.mxu0 %v661
    %976 = vmatprep.subr.bf16.mxu0 %v666
    %977 = vmatpush1.bf16.msra.mxu0 %v665
    %978 = vmatprep.subr.bf16.mxu0 %v670
    %979 = vmatpush1.bf16.msra.mxu0 %v669
    %980 = vmatprep.subr.bf16.mxu0 %v674
    %981 = vmatpush1.bf16.msra.mxu0 %v673
    %982 = vmatprep.subr.bf16.mxu0 %v678
    %983 = vmatpush1.bf16.msra.mxu0 %v677
    %984 = vmatprep.subr.bf16.mxu0 %v682
    %985 = vmatpush1.bf16.msra.mxu0 %v681
    %986 = vmatprep.subr.bf16.mxu0 %v686
    %987 = vmatpush1.bf16.msra.mxu0 %v685
    %988 = vmatprep.subr.bf16.mxu0 %v690
    %989 = vmatpush1.bf16.msra.mxu0 %v689
    %990 = vmatprep.subr.bf16.mxu0 %v694
    %991 = vmatpush1.bf16.msra.mxu0 %v693
    %992 = vmatprep.subr.bf16.mxu0 %v698
    %993 = vmatpush1.bf16.msra.mxu0 %v697
    %994 = vmatprep.subr.bf16.mxu0 %v702
    %995 = vmatpush1.bf16.msra.mxu0 %v701
    %996 = vmatprep.subr.bf16.mxu0 %v706
    %997 = vmatpush1.bf16.msra.mxu0 %v705
    %998 = vmatprep.subr.bf16.mxu0 %v710
    %999 = vmatpush1.bf16.msra.mxu0 %v709
    %1000 = vmatprep.subr.bf16.mxu0 %v714
    %1001 = vmatpush1.bf16.msra.mxu0 %v713
    %1002 = vmatprep.subr.bf16.mxu0 %v718
    %1003 = vmatpush1.bf16.msra.mxu0 %v717
    %1004 = vmatprep.subr.bf16.mxu0 %v722
    %1005 = vmatpush1.bf16.msra.mxu0 %v721
    %1006 = vmatprep.mubr.bf16.mxu0 %v82
    %1007 = vmatmul.mubr.bf16.gmra.mrb[0].mxu0 %v81
    %v1008 = vpop.f32.mrb[0].mxu0
    %v1009 = vadd.f32 %v968, %v1008
    %v1010 = vpop.f32.mrb[0].mxu0
    %v1011 = vadd.f32 %v970, %v1010
    %v1012 = vpop.f32.mrb[0].mxu0
    %v1013 = vpop.f32.mrb[0].mxu0
    %1014 = vdwg.mxu0
    %v1015 = vmax.f32 %v927, 0.0
    %v1016 = vmax.f32 %v929, 0.0
    %v1017 = vmax.f32 %v1009, 0.0
    %v1018 = vmax.f32 %v1011, 0.0
    %v1019 = vpack.c.bf16 %v1015, %v1015
    %v1020 = vpack.c.bf16 %v1016, %v1016
    %v1021 = vpack.c.bf16 %v1017, %v1017
    %v1022 = vpack.c.bf16 %v1018, %v1018
    %v1023 = vld [vmem:[#allocation7] sm:$0xff]
    %v1024 = vld [vmem:[#allocation7 + $0x8] sm:$0xff]
    %v1025 = vld [vmem:[#allocation7 + $0x10] sm:$0xff]
    %v1026 = vld [vmem:[#allocation7 + $0x18] sm:$0xff]
    %v1027 = vld [vmem:[#allocation7 + $0x20] sm:$0xff]
    %v1028 = vld [vmem:[#allocation7 + $0x28] sm:$0xff]
    %v1029 = vld [vmem:[#allocation7 + $0x30] sm:$0xff]
    %v1030 = vld [vmem:[#allocation7 + $0x38] sm:$0xff]
    %v1031 = vld [vmem:[#allocation7 + $0x40] sm:$0xff]
    %v1032 = vld [vmem:[#allocation7 + $0x48] sm:$0xff]
    %v1033 = vld [vmem:[#allocation7 + $0x50] sm:$0xff]
    %v1034 = vld [vmem:[#allocation7 + $0x58] sm:$0xff]
    %v1035 = vld [vmem:[#allocation7 + $0x60] sm:$0xff]
    %v1036 = vld [vmem:[#allocation7 + $0x68] sm:$0xff]
    %v1037 = vld [vmem:[#allocation7 + $0x70] sm:$0xff]
    %v1038 = vld [vmem:[#allocation7 + $0x78] sm:$0xff]
    %v1039 = vld [vmem:[#allocation7 + $0x80] sm:$0xff]
    %v1040 = vld [vmem:[#allocation7 + $0x88] sm:$0xff]
    %v1041 = vld [vmem:[#allocation7 + $0x90] sm:$0xff]
    %v1042 = vld [vmem:[#allocation7 + $0x98] sm:$0xff]
    %v1043 = vld [vmem:[#allocation7 + $0xa0] sm:$0xff]
    %v1044 = vld [vmem:[#allocation7 + $0xa8] sm:$0xff]
    %v1045 = vld [vmem:[#allocation7 + $0xb0] sm:$0xff]
    %v1046 = vld [vmem:[#allocation7 + $0xb8] sm:$0xff]
    %v1047 = vld [vmem:[#allocation7 + $0xc0] sm:$0xff]
    %v1048 = vld [vmem:[#allocation7 + $0xc8] sm:$0xff]
    %v1049 = vld [vmem:[#allocation7 + $0xd0] sm:$0xff]
    %v1050 = vld [vmem:[#allocation7 + $0xd8] sm:$0xff]
    %v1051 = vld [vmem:[#allocation7 + $0xe0] sm:$0xff]
    %v1052 = vld [vmem:[#allocation7 + $0xe8] sm:$0xff]
    %v1053 = vld [vmem:[#allocation7 + $0xf0] sm:$0xff]
    %v1054 = vld [vmem:[#allocation7 + $0xf8] sm:$0xff]
    %v1055 = vld [vmem:[#allocation7 + $0x100] sm:$0xff]
    %v1056 = vld [vmem:[#allocation7 + $0x108] sm:$0xff]
    %v1057 = vld [vmem:[#allocation7 + $0x110] sm:$0xff]
    %v1058 = vld [vmem:[#allocation7 + $0x118] sm:$0xff]
    %v1059 = vld [vmem:[#allocation7 + $0x120] sm:$0xff]
    %v1060 = vld [vmem:[#allocation7 + $0x128] sm:$0xff]
    %v1061 = vld [vmem:[#allocation7 + $0x130] sm:$0xff]
    %v1062 = vld [vmem:[#allocation7 + $0x138] sm:$0xff]
    %v1063 = vld [vmem:[#allocation7 + $0x140] sm:$0xff]
    %v1064 = vld [vmem:[#allocation7 + $0x148] sm:$0xff]
    %v1065 = vld [vmem:[#allocation7 + $0x150] sm:$0xff]
    %v1066 = vld [vmem:[#allocation7 + $0x158] sm:$0xff]
    %v1067 = vld [vmem:[#allocation7 + $0x160] sm:$0xff]
    %v1068 = vld [vmem:[#allocation7 + $0x168] sm:$0xff]
    %v1069 = vld [vmem:[#allocation7 + $0x170] sm:$0xff]
    %v1070 = vld [vmem:[#allocation7 + $0x178] sm:$0xff]
    %v1071 = vld [vmem:[#allocation7 + $0x180] sm:$0xff]
    %v1072 = vld [vmem:[#allocation7 + $0x188] sm:$0xff]
    %v1073 = vld [vmem:[#allocation7 + $0x190] sm:$0xff]
    %v1074 = vld [vmem:[#allocation7 + $0x198] sm:$0xff]
    %v1075 = vld [vmem:[#allocation7 + $0x1a0] sm:$0xff]
    %v1076 = vld [vmem:[#allocation7 + $0x1a8] sm:$0xff]
    %v1077 = vld [vmem:[#allocation7 + $0x1b0] sm:$0xff]
    %v1078 = vld [vmem:[#allocation7 + $0x1b8] sm:$0xff]
    %v1079 = vld [vmem:[#allocation7 + $0x1c0] sm:$0xff]
    %v1080 = vld [vmem:[#allocation7 + $0x1c8] sm:$0xff]
    %v1081 = vld [vmem:[#allocation7 + $0x1d0] sm:$0xff]
    %v1082 = vld [vmem:[#allocation7 + $0x1d8] sm:$0xff]
    %v1083 = vld [vmem:[#allocation7 + $0x1e0] sm:$0xff]
    %v1084 = vld [vmem:[#allocation7 + $0x1e8] sm:$0xff]
    %v1085 = vld [vmem:[#allocation7 + $0x1f0] sm:$0xff]
    %v1086 = vld [vmem:[#allocation7 + $0x1f8] sm:$0xff]
    %v1087 = vld [vmem:[#allocation7 + $0x200] sm:$0xff]
    %v1088 = vld [vmem:[#allocation7 + $0x208] sm:$0xff]
    %v1089 = vld [vmem:[#allocation7 + $0x210] sm:$0xff]
    %v1090 = vld [vmem:[#allocation7 + $0x218] sm:$0xff]
    %v1091 = vld [vmem:[#allocation7 + $0x220] sm:$0xff]
    %v1092 = vld [vmem:[#allocation7 + $0x228] sm:$0xff]
    %v1093 = vld [vmem:[#allocation7 + $0x230] sm:$0xff]
    %v1094 = vld [vmem:[#allocation7 + $0x238] sm:$0xff]
    %v1095 = vld [vmem:[#allocation7 + $0x240] sm:$0xff]
    %v1096 = vld [vmem:[#allocation7 + $0x248] sm:$0xff]
    %v1097 = vld [vmem:[#allocation7 + $0x250] sm:$0xff]
    %v1098 = vld [vmem:[#allocation7 + $0x258] sm:$0xff]
    %v1099 = vld [vmem:[#allocation7 + $0x260] sm:$0xff]
    %v1100 = vld [vmem:[#allocation7 + $0x268] sm:$0xff]
    %v1101 = vld [vmem:[#allocation7 + $0x270] sm:$0xff]
    %v1102 = vld [vmem:[#allocation7 + $0x278] sm:$0xff]
    %v1103 = vld [vmem:[#allocation7 + $0x280] sm:$0xff]
    %v1104 = vld [vmem:[#allocation7 + $0x288] sm:$0xff]
    %v1105 = vld [vmem:[#allocation7 + $0x290] sm:$0xff]
    %v1106 = vld [vmem:[#allocation7 + $0x298] sm:$0xff]
    %v1107 = vld [vmem:[#allocation7 + $0x2a0] sm:$0xff]
    %v1108 = vld [vmem:[#allocation7 + $0x2a8] sm:$0xff]
    %v1109 = vld [vmem:[#allocation7 + $0x2b0] sm:$0xff]
    %v1110 = vld [vmem:[#allocation7 + $0x2b8] sm:$0xff]
    %v1111 = vld [vmem:[#allocation7 + $0x2c0] sm:$0xff]
    %v1112 = vld [vmem:[#allocation7 + $0x2c8] sm:$0xff]
    %v1113 = vld [vmem:[#allocation7 + $0x2d0] sm:$0xff]
    %v1114 = vld [vmem:[#allocation7 + $0x2d8] sm:$0xff]
    %v1115 = vld [vmem:[#allocation7 + $0x2e0] sm:$0xff]
    %v1116 = vld [vmem:[#allocation7 + $0x2e8] sm:$0xff]
    %v1117 = vld [vmem:[#allocation7 + $0x2f0] sm:$0xff]
    %v1118 = vld [vmem:[#allocation7 + $0x2f8] sm:$0xff]
    %v1119 = vld [vmem:[#allocation7 + $0x300] sm:$0xff]
    %v1120 = vld [vmem:[#allocation7 + $0x308] sm:$0xff]
    %v1121 = vld [vmem:[#allocation7 + $0x310] sm:$0xff]
    %v1122 = vld [vmem:[#allocation7 + $0x318] sm:$0xff]
    %v1123 = vld [vmem:[#allocation7 + $0x320] sm:$0xff]
    %v1124 = vld [vmem:[#allocation7 + $0x328] sm:$0xff]
    %v1125 = vld [vmem:[#allocation7 + $0x330] sm:$0xff]
    %v1126 = vld [vmem:[#allocation7 + $0x338] sm:$0xff]
    %v1127 = vld [vmem:[#allocation7 + $0x340] sm:$0xff]
    %v1128 = vld [vmem:[#allocation7 + $0x348] sm:$0xff]
    %v1129 = vld [vmem:[#allocation7 + $0x350] sm:$0xff]
    %v1130 = vld [vmem:[#allocation7 + $0x358] sm:$0xff]
    %v1131 = vld [vmem:[#allocation7 + $0x360] sm:$0xff]
    %v1132 = vld [vmem:[#allocation7 + $0x368] sm:$0xff]
    %v1133 = vld [vmem:[#allocation7 + $0x370] sm:$0xff]
    %v1134 = vld [vmem:[#allocation7 + $0x378] sm:$0xff]
    %v1135 = vld [vmem:[#allocation7 + $0x380] sm:$0xff]
    %v1136 = vld [vmem:[#allocation7 + $0x388] sm:$0xff]
    %v1137 = vld [vmem:[#allocation7 + $0x390] sm:$0xff]
    %v1138 = vld [vmem:[#allocation7 + $0x398] sm:$0xff]
    %v1139 = vld [vmem:[#allocation7 + $0x3a0] sm:$0xff]
    %v1140 = vld [vmem:[#allocation7 + $0x3a8] sm:$0xff]
    %v1141 = vld [vmem:[#allocation7 + $0x3b0] sm:$0xff]
    %v1142 = vld [vmem:[#allocation7 + $0x3b8] sm:$0xff]
    %v1143 = vld [vmem:[#allocation7 + $0x3c0] sm:$0xff]
    %v1144 = vld [vmem:[#allocation7 + $0x3c8] sm:$0xff]
    %v1145 = vld [vmem:[#allocation7 + $0x3d0] sm:$0xff]
    %v1146 = vld [vmem:[#allocation7 + $0x3d8] sm:$0xff]
    %v1147 = vld [vmem:[#allocation7 + $0x3e0] sm:$0xff]
    %v1148 = vld [vmem:[#allocation7 + $0x3e8] sm:$0xff]
    %v1149 = vld [vmem:[#allocation7 + $0x3f0] sm:$0xff]
    %v1150 = vld [vmem:[#allocation7 + $0x3f8] sm:$0xff]
    %v1152 = vlaneseq
    %v1153 = vshrl.u32 %v1152, 7
    %v1154 = vsub.s32 0, %v1153
    %v1155 = vrot.slane %v74, %v1154
    %v1156 = vlaneseq
    %v1157 = vshrl.u32 %v1156, 7
    %v1158 = vsub.s32 1, %v1157
    %v1159 = vrot.slane %v74, %v1158
    %v1160 = vlaneseq
    %v1161 = vshrl.u32 %v1160, 7
    %v1162 = vsub.s32 2, %v1161
    %v1163 = vrot.slane %v74, %v1162
    %v1164 = vlaneseq
    %v1165 = vshrl.u32 %v1164, 7
    %v1166 = vsub.s32 3, %v1165
    %v1167 = vrot.slane %v74, %v1166
    %v1300 = vunpack.c.l.b16 %v1023
    %v1301 = vunpack.c.h.b16 %v1023
    %v1302 = vunpack.c.l.b16 %v1024
    %v1303 = vunpack.c.h.b16 %v1024
    %v1304 = vunpack.c.l.b16 %v1025
    %v1305 = vunpack.c.h.b16 %v1025
    %v1306 = vunpack.c.l.b16 %v1026
    %v1307 = vunpack.c.h.b16 %v1026
    %v1308 = vunpack.c.l.b16 %v1027
    %v1309 = vunpack.c.h.b16 %v1027
    %v1310 = vunpack.c.l.b16 %v1028
    %v1311 = vunpack.c.h.b16 %v1028
    %v1312 = vunpack.c.l.b16 %v1029
    %v1313 = vunpack.c.h.b16 %v1029
    %v1314 = vunpack.c.l.b16 %v1030
    %v1315 = vunpack.c.h.b16 %v1030
    %v1316 = vunpack.c.l.b16 %v1031
    %v1317 = vunpack.c.h.b16 %v1031
    %v1318 = vunpack.c.l.b16 %v1032
    %v1319 = vunpack.c.h.b16 %v1032
    %v1320 = vunpack.c.l.b16 %v1033
    %v1321 = vunpack.c.h.b16 %v1033
    %v1322 = vunpack.c.l.b16 %v1034
    %v1323 = vunpack.c.h.b16 %v1034
    %v1324 = vunpack.c.l.b16 %v1035
    %v1325 = vunpack.c.h.b16 %v1035
    %v1326 = vunpack.c.l.b16 %v1036
    %v1327 = vunpack.c.h.b16 %v1036
    %v1328 = vunpack.c.l.b16 %v1037
    %v1329 = vunpack.c.h.b16 %v1037
    %v1330 = vunpack.c.l.b16 %v1038
    %v1331 = vunpack.c.h.b16 %v1038
    %v1332 = vunpack.c.l.b16 %v1039
    %v1333 = vunpack.c.h.b16 %v1039
    %v1334 = vunpack.c.l.b16 %v1040
    %v1335 = vunpack.c.h.b16 %v1040
    %v1336 = vunpack.c.l.b16 %v1041
    %v1337 = vunpack.c.h.b16 %v1041
    %v1338 = vunpack.c.l.b16 %v1042
    %v1339 = vunpack.c.h.b16 %v1042
    %v1340 = vunpack.c.l.b16 %v1043
    %v1341 = vunpack.c.h.b16 %v1043
    %v1342 = vunpack.c.l.b16 %v1044
    %v1343 = vunpack.c.h.b16 %v1044
    %v1344 = vunpack.c.l.b16 %v1045
    %v1345 = vunpack.c.h.b16 %v1045
    %v1346 = vunpack.c.l.b16 %v1046
    %v1347 = vunpack.c.h.b16 %v1046
    %v1348 = vunpack.c.l.b16 %v1047
    %v1349 = vunpack.c.h.b16 %v1047
    %v1350 = vunpack.c.l.b16 %v1048
    %v1351 = vunpack.c.h.b16 %v1048
    %v1352 = vunpack.c.l.b16 %v1049
    %v1353 = vunpack.c.h.b16 %v1049
    %v1354 = vunpack.c.l.b16 %v1050
    %v1355 = vunpack.c.h.b16 %v1050
    %v1356 = vunpack.c.l.b16 %v1051
    %v1357 = vunpack.c.h.b16 %v1051
    %v1358 = vunpack.c.l.b16 %v1052
    %v1359 = vunpack.c.h.b16 %v1052
    %v1360 = vunpack.c.l.b16 %v1053
    %v1361 = vunpack.c.h.b16 %v1053
    %v1362 = vunpack.c.l.b16 %v1054
    %v1363 = vunpack.c.h.b16 %v1054
    %v1364 = vunpack.c.l.b16 %v1055
    %v1365 = vunpack.c.h.b16 %v1055
    %v1366 = vunpack.c.l.b16 %v1056
    %v1367 = vunpack.c.h.b16 %v1056
    %v1368 = vunpack.c.l.b16 %v1057
    %v1369 = vunpack.c.h.b16 %v1057
    %v1370 = vunpack.c.l.b16 %v1058
    %v1371 = vunpack.c.h.b16 %v1058
    %v1372 = vunpack.c.l.b16 %v1059
    %v1373 = vunpack.c.h.b16 %v1059
    %v1374 = vunpack.c.l.b16 %v1060
    %v1375 = vunpack.c.h.b16 %v1060
    %v1376 = vunpack.c.l.b16 %v1061
    %v1377 = vunpack.c.h.b16 %v1061
    %v1378 = vunpack.c.l.b16 %v1062
    %v1379 = vunpack.c.h.b16 %v1062
    %v1380 = vunpack.c.l.b16 %v1063
    %v1381 = vunpack.c.h.b16 %v1063
    %v1382 = vunpack.c.l.b16 %v1064
    %v1383 = vunpack.c.h.b16 %v1064
    %v1384 = vunpack.c.l.b16 %v1065
    %v1385 = vunpack.c.h.b16 %v1065
    %v1386 = vunpack.c.l.b16 %v1066
    %v1387 = vunpack.c.h.b16 %v1066
    %v1388 = vunpack.c.l.b16 %v1067
    %v1389 = vunpack.c.h.b16 %v1067
    %v1390 = vunpack.c.l.b16 %v1068
    %v1391 = vunpack.c.h.b16 %v1068
    %v1392 = vunpack.c.l.b16 %v1069
    %v1393 = vunpack.c.h.b16 %v1069
    %v1394 = vunpack.c.l.b16 %v1070
    %v1395 = vunpack.c.h.b16 %v1070
    %v1396 = vunpack.c.l.b16 %v1071
    %v1397 = vunpack.c.h.b16 %v1071
    %v1398 = vunpack.c.l.b16 %v1072
    %v1399 = vunpack.c.h.b16 %v1072
    %v1400 = vunpack.c.l.b16 %v1073
    %v1401 = vunpack.c.h.b16 %v1073
    %v1402 = vunpack.c.l.b16 %v1074
    %v1403 = vunpack.c.h.b16 %v1074
    %v1404 = vunpack.c.l.b16 %v1075
    %v1405 = vunpack.c.h.b16 %v1075
    %v1406 = vunpack.c.l.b16 %v1076
    %v1407 = vunpack.c.h.b16 %v1076
    %v1408 = vunpack.c.l.b16 %v1077
    %v1409 = vunpack.c.h.b16 %v1077
    %v1410 = vunpack.c.l.b16 %v1078
    %v1411 = vunpack.c.h.b16 %v1078
    %v1412 = vunpack.c.l.b16 %v1079
    %v1413 = vunpack.c.h.b16 %v1079
    %v1414 = vunpack.c.l.b16 %v1080
    %v1415 = vunpack.c.h.b16 %v1080
    %v1416 = vunpack.c.l.b16 %v1081
    %v1417 = vunpack.c.h.b16 %v1081
    %v1418 = vunpack.c.l.b16 %v1082
    %v1419 = vunpack.c.h.b16 %v1082
    %v1420 = vunpack.c.l.b16 %v1083
    %v1421 = vunpack.c.h.b16 %v1083
    %v1422 = vunpack.c.l.b16 %v1084
    %v1423 = vunpack.c.h.b16 %v1084
    %v1424 = vunpack.c.l.b16 %v1085
    %v1425 = vunpack.c.h.b16 %v1085
    %v1426 = vunpack.c.l.b16 %v1086
    %v1427 = vunpack.c.h.b16 %v1086
    %v1428 = vunpack.c.l.b16 %v1087
    %v1429 = vunpack.c.h.b16 %v1087
    %v1430 = vunpack.c.l.b16 %v1088
    %v1431 = vunpack.c.h.b16 %v1088
    %v1432 = vunpack.c.l.b16 %v1089
    %v1433 = vunpack.c.h.b16 %v1089
    %v1434 = vunpack.c.l.b16 %v1090
    %v1435 = vunpack.c.h.b16 %v1090
    %v1436 = vunpack.c.l.b16 %v1091
    %v1437 = vunpack.c.h.b16 %v1091
    %v1438 = vunpack.c.l.b16 %v1092
    %v1439 = vunpack.c.h.b16 %v1092
    %v1440 = vunpack.c.l.b16 %v1093
    %v1441 = vunpack.c.h.b16 %v1093
    %v1442 = vunpack.c.l.b16 %v1094
    %v1443 = vunpack.c.h.b16 %v1094
    %v1444 = vunpack.c.l.b16 %v1095
    %v1445 = vunpack.c.h.b16 %v1095
    %v1446 = vunpack.c.l.b16 %v1096
    %v1447 = vunpack.c.h.b16 %v1096
    %v1448 = vunpack.c.l.b16 %v1097
    %v1449 = vunpack.c.h.b16 %v1097
    %v1450 = vunpack.c.l.b16 %v1098
    %v1451 = vunpack.c.h.b16 %v1098
    %v1452 = vunpack.c.l.b16 %v1099
    %v1453 = vunpack.c.h.b16 %v1099
    %v1454 = vunpack.c.l.b16 %v1100
    %v1455 = vunpack.c.h.b16 %v1100
    %v1456 = vunpack.c.l.b16 %v1101
    %v1457 = vunpack.c.h.b16 %v1101
    %v1458 = vunpack.c.l.b16 %v1102
    %v1459 = vunpack.c.h.b16 %v1102
    %v1460 = vunpack.c.l.b16 %v1103
    %v1461 = vunpack.c.h.b16 %v1103
    %v1462 = vunpack.c.l.b16 %v1104
    %v1463 = vunpack.c.h.b16 %v1104
    %v1464 = vunpack.c.l.b16 %v1105
    %v1465 = vunpack.c.h.b16 %v1105
    %v1466 = vunpack.c.l.b16 %v1106
    %v1467 = vunpack.c.h.b16 %v1106
    %v1468 = vunpack.c.l.b16 %v1107
    %v1469 = vunpack.c.h.b16 %v1107
    %v1470 = vunpack.c.l.b16 %v1108
    %v1471 = vunpack.c.h.b16 %v1108
    %v1472 = vunpack.c.l.b16 %v1109
    %v1473 = vunpack.c.h.b16 %v1109
    %v1474 = vunpack.c.l.b16 %v1110
    %v1475 = vunpack.c.h.b16 %v1110
    %v1476 = vunpack.c.l.b16 %v1111
    %v1477 = vunpack.c.h.b16 %v1111
    %v1478 = vunpack.c.l.b16 %v1112
    %v1479 = vunpack.c.h.b16 %v1112
    %v1480 = vunpack.c.l.b16 %v1113
    %v1481 = vunpack.c.h.b16 %v1113
    %v1482 = vunpack.c.l.b16 %v1114
    %v1483 = vunpack.c.h.b16 %v1114
    %v1484 = vunpack.c.l.b16 %v1115
    %v1485 = vunpack.c.h.b16 %v1115
    %v1486 = vunpack.c.l.b16 %v1116
    %v1487 = vunpack.c.h.b16 %v1116
    %v1488 = vunpack.c.l.b16 %v1117
    %v1489 = vunpack.c.h.b16 %v1117
    %v1490 = vunpack.c.l.b16 %v1118
    %v1491 = vunpack.c.h.b16 %v1118
    %v1492 = vunpack.c.l.b16 %v1119
    %v1493 = vunpack.c.h.b16 %v1119
    %v1494 = vunpack.c.l.b16 %v1120
    %v1495 = vunpack.c.h.b16 %v1120
    %v1496 = vunpack.c.l.b16 %v1121
    %v1497 = vunpack.c.h.b16 %v1121
    %v1498 = vunpack.c.l.b16 %v1122
    %v1499 = vunpack.c.h.b16 %v1122
    %v1500 = vunpack.c.l.b16 %v1123
    %v1501 = vunpack.c.h.b16 %v1123
    %v1502 = vunpack.c.l.b16 %v1124
    %v1503 = vunpack.c.h.b16 %v1124
    %v1504 = vunpack.c.l.b16 %v1125
    %v1505 = vunpack.c.h.b16 %v1125
    %v1506 = vunpack.c.l.b16 %v1126
    %v1507 = vunpack.c.h.b16 %v1126
    %v1508 = vunpack.c.l.b16 %v1127
    %v1509 = vunpack.c.h.b16 %v1127
    %v1510 = vunpack.c.l.b16 %v1128
    %v1511 = vunpack.c.h.b16 %v1128
    %v1512 = vunpack.c.l.b16 %v1129
    %v1513 = vunpack.c.h.b16 %v1129
    %v1514 = vunpack.c.l.b16 %v1130
    %v1515 = vunpack.c.h.b16 %v1130
    %v1516 = vunpack.c.l.b16 %v1131
    %v1517 = vunpack.c.h.b16 %v1131
    %v1518 = vunpack.c.l.b16 %v1132
    %v1519 = vunpack.c.h.b16 %v1132
    %v1520 = vunpack.c.l.b16 %v1133
    %v1521 = vunpack.c.h.b16 %v1133
    %v1522 = vunpack.c.l.b16 %v1134
    %v1523 = vunpack.c.h.b16 %v1134
    %v1524 = vunpack.c.l.b16 %v1135
    %v1525 = vunpack.c.h.b16 %v1135
    %v1526 = vunpack.c.l.b16 %v1136
    %v1527 = vunpack.c.h.b16 %v1136
    %v1528 = vunpack.c.l.b16 %v1137
    %v1529 = vunpack.c.h.b16 %v1137
    %v1530 = vunpack.c.l.b16 %v1138
    %v1531 = vunpack.c.h.b16 %v1138
    %v1532 = vunpack.c.l.b16 %v1139
    %v1533 = vunpack.c.h.b16 %v1139
    %v1534 = vunpack.c.l.b16 %v1140
    %v1535 = vunpack.c.h.b16 %v1140
    %v1536 = vunpack.c.l.b16 %v1141
    %v1537 = vunpack.c.h.b16 %v1141
    %v1538 = vunpack.c.l.b16 %v1142
    %v1539 = vunpack.c.h.b16 %v1142
    %v1540 = vunpack.c.l.b16 %v1143
    %v1541 = vunpack.c.h.b16 %v1143
    %v1542 = vunpack.c.l.b16 %v1144
    %v1543 = vunpack.c.h.b16 %v1144
    %v1544 = vunpack.c.l.b16 %v1145
    %v1545 = vunpack.c.h.b16 %v1145
    %v1546 = vunpack.c.l.b16 %v1146
    %v1547 = vunpack.c.h.b16 %v1146
    %v1548 = vunpack.c.l.b16 %v1147
    %v1549 = vunpack.c.h.b16 %v1147
    %v1550 = vunpack.c.l.b16 %v1148
    %v1551 = vunpack.c.h.b16 %v1148
    %v1552 = vunpack.c.l.b16 %v1149
    %v1553 = vunpack.c.h.b16 %v1149
    %v1554 = vunpack.c.l.b16 %v1150
    %v1555 = vunpack.c.h.b16 %v1150
    %v1556 = vpack.c.b16 %v1304, %v1300
    %v1557 = vpack.c.b16 %v1305, %v1301
    %v1558 = vpack.c.b16 %v1306, %v1302
    %v1559 = vpack.c.b16 %v1307, %v1303
    %v1560 = vpack.c.b16 %v1312, %v1308
    %v1561 = vpack.c.b16 %v1313, %v1309
    %v1562 = vpack.c.b16 %v1314, %v1310
    %v1563 = vpack.c.b16 %v1315, %v1311
    %v1564 = vpack.c.b16 %v1320, %v1316
    %v1565 = vpack.c.b16 %v1321, %v1317
    %v1566 = vpack.c.b16 %v1322, %v1318
    %v1567 = vpack.c.b16 %v1323, %v1319
    %v1568 = vpack.c.b16 %v1328, %v1324
    %v1569 = vpack.c.b16 %v1329, %v1325
    %v1570 = vpack.c.b16 %v1330, %v1326
    %v1571 = vpack.c.b16 %v1331, %v1327
    %v1572 = vpack.c.b16 %v1336, %v1332
    %v1573 = vpack.c.b16 %v1337, %v1333
    %v1574 = vpack.c.b16 %v1338, %v1334
    %v1575 = vpack.c.b16 %v1339, %v1335
    %v1576 = vpack.c.b16 %v1344, %v1340
    %v1577 = vpack.c.b16 %v1345, %v1341
    %v1578 = vpack.c.b16 %v1346, %v1342
    %v1579 = vpack.c.b16 %v1347, %v1343
    %v1580 = vpack.c.b16 %v1352, %v1348
    %v1581 = vpack.c.b16 %v1353, %v1349
    %v1582 = vpack.c.b16 %v1354, %v1350
    %v1583 = vpack.c.b16 %v1355, %v1351
    %v1584 = vpack.c.b16 %v1360, %v1356
    %v1585 = vpack.c.b16 %v1361, %v1357
    %v1586 = vpack.c.b16 %v1362, %v1358
    %v1587 = vpack.c.b16 %v1363, %v1359
    %v1588 = vpack.c.b16 %v1368, %v1364
    %v1589 = vpack.c.b16 %v1369, %v1365
    %v1590 = vpack.c.b16 %v1370, %v1366
    %v1591 = vpack.c.b16 %v1371, %v1367
    %v1592 = vpack.c.b16 %v1376, %v1372
    %v1593 = vpack.c.b16 %v1377, %v1373
    %v1594 = vpack.c.b16 %v1378, %v1374
    %v1595 = vpack.c.b16 %v1379, %v1375
    %v1596 = vpack.c.b16 %v1384, %v1380
    %v1597 = vpack.c.b16 %v1385, %v1381
    %v1598 = vpack.c.b16 %v1386, %v1382
    %v1599 = vpack.c.b16 %v1387, %v1383
    %v1600 = vpack.c.b16 %v1392, %v1388
    %v1601 = vpack.c.b16 %v1393, %v1389
    %v1602 = vpack.c.b16 %v1394, %v1390
    %v1603 = vpack.c.b16 %v1395, %v1391
    %v1604 = vpack.c.b16 %v1400, %v1396
    %v1605 = vpack.c.b16 %v1401, %v1397
    %v1606 = vpack.c.b16 %v1402, %v1398
    %v1607 = vpack.c.b16 %v1403, %v1399
    %v1608 = vpack.c.b16 %v1408, %v1404
    %v1609 = vpack.c.b16 %v1409, %v1405
    %v1610 = vpack.c.b16 %v1410, %v1406
    %v1611 = vpack.c.b16 %v1411, %v1407
    %v1612 = vpack.c.b16 %v1416, %v1412
    %v1613 = vpack.c.b16 %v1417, %v1413
    %v1614 = vpack.c.b16 %v1418, %v1414
    %v1615 = vpack.c.b16 %v1419, %v1415
    %v1616 = vpack.c.b16 %v1424, %v1420
    %v1617 = vpack.c.b16 %v1425, %v1421
    %v1618 = vpack.c.b16 %v1426, %v1422
    %v1619 = vpack.c.b16 %v1427, %v1423
    %v1620 = vpack.c.b16 %v1432, %v1428
    %v1621 = vpack.c.b16 %v1433, %v1429
    %v1622 = vpack.c.b16 %v1434, %v1430
    %v1623 = vpack.c.b16 %v1435, %v1431
    %v1624 = vpack.c.b16 %v1440, %v1436
    %v1625 = vpack.c.b16 %v1441, %v1437
    %v1626 = vpack.c.b16 %v1442, %v1438
    %v1627 = vpack.c.b16 %v1443, %v1439
    %v1628 = vpack.c.b16 %v1448, %v1444
    %v1629 = vpack.c.b16 %v1449, %v1445
    %v1630 = vpack.c.b16 %v1450, %v1446
    %v1631 = vpack.c.b16 %v1451, %v1447
    %v1632 = vpack.c.b16 %v1456, %v1452
    %v1633 = vpack.c.b16 %v1457, %v1453
    %v1634 = vpack.c.b16 %v1458, %v1454
    %v1635 = vpack.c.b16 %v1459, %v1455
    %v1636 = vpack.c.b16 %v1464, %v1460
    %v1637 = vpack.c.b16 %v1465, %v1461
    %v1638 = vpack.c.b16 %v1466, %v1462
    %v1639 = vpack.c.b16 %v1467, %v1463
    %v1640 = vpack.c.b16 %v1472, %v1468
    %v1641 = vpack.c.b16 %v1473, %v1469
    %v1642 = vpack.c.b16 %v1474, %v1470
    %v1643 = vpack.c.b16 %v1475, %v1471
    %v1644 = vpack.c.b16 %v1480, %v1476
    %v1645 = vpack.c.b16 %v1481, %v1477
    %v1646 = vpack.c.b16 %v1482, %v1478
    %v1647 = vpack.c.b16 %v1483, %v1479
    %v1648 = vpack.c.b16 %v1488, %v1484
    %v1649 = vpack.c.b16 %v1489, %v1485
    %v1650 = vpack.c.b16 %v1490, %v1486
    %v1651 = vpack.c.b16 %v1491, %v1487
    %v1652 = vpack.c.b16 %v1496, %v1492
    %v1653 = vpack.c.b16 %v1497, %v1493
    %v1654 = vpack.c.b16 %v1498, %v1494
    %v1655 = vpack.c.b16 %v1499, %v1495
    %v1656 = vpack.c.b16 %v1504, %v1500
    %v1657 = vpack.c.b16 %v1505, %v1501
    %v1658 = vpack.c.b16 %v1506, %v1502
    %v1659 = vpack.c.b16 %v1507, %v1503
    %v1660 = vpack.c.b16 %v1512, %v1508
    %v1661 = vpack.c.b16 %v1513, %v1509
    %v1662 = vpack.c.b16 %v1514, %v1510
    %v1663 = vpack.c.b16 %v1515, %v1511
    %v1664 = vpack.c.b16 %v1520, %v1516
    %v1665 = vpack.c.b16 %v1521, %v1517
    %v1666 = vpack.c.b16 %v1522, %v1518
    %v1667 = vpack.c.b16 %v1523, %v1519
    %v1668 = vpack.c.b16 %v1528, %v1524
    %v1669 = vpack.c.b16 %v1529, %v1525
    %v1670 = vpack.c.b16 %v1530, %v1526
    %v1671 = vpack.c.b16 %v1531, %v1527
    %v1672 = vpack.c.b16 %v1536, %v1532
    %v1673 = vpack.c.b16 %v1537, %v1533
    %v1674 = vpack.c.b16 %v1538, %v1534
    %v1675 = vpack.c.b16 %v1539, %v1535
    %v1676 = vpack.c.b16 %v1544, %v1540
    %v1677 = vpack.c.b16 %v1545, %v1541
    %v1678 = vpack.c.b16 %v1546, %v1542
    %v1679 = vpack.c.b16 %v1547, %v1543
    %v1680 = vpack.c.b16 %v1552, %v1548
    %v1681 = vpack.c.b16 %v1553, %v1549
    %v1682 = vpack.c.b16 %v1554, %v1550
    %v1683 = vpack.c.b16 %v1555, %v1551
    %1812 = vmatprep.subr.bf16.mxu0 %v1557
    %1813 = vmatpush1.bf16.msra.mxu0 %v1556
    %1814 = vmatprep.subr.bf16.mxu0 %v1561
    %1815 = vmatpush1.bf16.msra.mxu0 %v1560
    %1816 = vmatprep.subr.bf16.mxu0 %v1565
    %1817 = vmatpush1.bf16.msra.mxu0 %v1564
    %1818 = vmatprep.subr.bf16.mxu0 %v1569
    %1819 = vmatpush1.bf16.msra.mxu0 %v1568
    %1820 = vmatprep.subr.bf16.mxu0 %v1573
    %1821 = vmatpush1.bf16.msra.mxu0 %v1572
    %1822 = vmatprep.subr.bf16.mxu0 %v1577
    %1823 = vmatpush1.bf16.msra.mxu0 %v1576
    %1824 = vmatprep.subr.bf16.mxu0 %v1581
    %1825 = vmatpush1.bf16.msra.mxu0 %v1580
    %1826 = vmatprep.subr.bf16.mxu0 %v1585
    %1827 = vmatpush1.bf16.msra.mxu0 %v1584
    %1828 = vmatprep.subr.bf16.mxu0 %v1589
    %1829 = vmatpush1.bf16.msra.mxu0 %v1588
    %1830 = vmatprep.subr.bf16.mxu0 %v1593
    %1831 = vmatpush1.bf16.msra.mxu0 %v1592
    %1832 = vmatprep.subr.bf16.mxu0 %v1597
    %1833 = vmatpush1.bf16.msra.mxu0 %v1596
    %1834 = vmatprep.subr.bf16.mxu0 %v1601
    %1835 = vmatpush1.bf16.msra.mxu0 %v1600
    %1836 = vmatprep.subr.bf16.mxu0 %v1605
    %1837 = vmatpush1.bf16.msra.mxu0 %v1604
    %1838 = vmatprep.subr.bf16.mxu0 %v1609
    %1839 = vmatpush1.bf16.msra.mxu0 %v1608
    %1840 = vmatprep.subr.bf16.mxu0 %v1613
    %1841 = vmatpush1.bf16.msra.mxu0 %v1612
    %1842 = vmatprep.subr.bf16.mxu0 %v1617
    %1843 = vmatpush1.bf16.msra.mxu0 %v1616
    %1844 = vmatprep.mubr.bf16.mxu0 %v1020
    %1845 = vmatmul.mubr.bf16.gmra.mrb[0].mxu0 %v1019
    %v1846 = vpop.f32.mrb[0].mxu0
    %v1847 = vadd.f32 %v1155, %v1846
    %v1848 = vpop.f32.mrb[0].mxu0
    %v1849 = vadd.f32 %v1159, %v1848
    %v1850 = vpop.f32.mrb[0].mxu0
    %v1851 = vpop.f32.mrb[0].mxu0
    %1852 = vdwg.mxu0
    %1853 = vmatprep.subr.bf16.mxu0 %v1621
    %1854 = vmatpush1.bf16.msra.mxu0 %v1620
    %1855 = vmatprep.subr.bf16.mxu0 %v1625
    %1856 = vmatpush1.bf16.msra.mxu0 %v1624
    %1857 = vmatprep.subr.bf16.mxu0 %v1629
    %1858 = vmatpush1.bf16.msra.mxu0 %v1628
    %1859 = vmatprep.subr.bf16.mxu0 %v1633
    %1860 = vmatpush1.bf16.msra.mxu0 %v1632
    %1861 = vmatprep.subr.bf16.mxu0 %v1637
    %1862 = vmatpush1.bf16.msra.mxu0 %v1636
    %1863 = vmatprep.subr.bf16.mxu0 %v1641
    %1864 = vmatpush1.bf16.msra.mxu0 %v1640
    %1865 = vmatprep.subr.bf16.mxu0 %v1645
    %1866 = vmatpush1.bf16.msra.mxu0 %v1644
    %1867 = vmatprep.subr.bf16.mxu0 %v1649
    %1868 = vmatpush1.bf16.msra.mxu0 %v1648
    %1869 = vmatprep.subr.bf16.mxu0 %v1653
    %1870 = vmatpush1.bf16.msra.mxu0 %v1652
    %1871 = vmatprep.subr.bf16.mxu0 %v1657
    %1872 = vmatpush1.bf16.msra.mxu0 %v1656
    %1873 = vmatprep.subr.bf16.mxu0 %v1661
    %1874 = vmatpush1.bf16.msra.mxu0 %v1660
    %1875 = vmatprep.subr.bf16.mxu0 %v1665
    %1876 = vmatpush1.bf16.msra.mxu0 %v1664
    %1877 = vmatprep.subr.bf16.mxu0 %v1669
    %1878 = vmatpush1.bf16.msra.mxu0 %v1668
    %1879 = vmatprep.subr.bf16.mxu0 %v1673
    %1880 = vmatpush1.bf16.msra.mxu0 %v1672
    %1881 = vmatprep.subr.bf16.mxu0 %v1677
    %1882 = vmatpush1.bf16.msra.mxu0 %v1676
    %1883 = vmatprep.subr.bf16.mxu0 %v1681
    %1884 = vmatpush1.bf16.msra.mxu0 %v1680
    %1885 = vmatprep.mubr.bf16.mxu0 %v1022
    %1886 = vmatmul.mubr.bf16.gmra.mrb[0].mxu0 %v1021
    %v1887 = vpop.f32.mrb[0].mxu0
    %v1888 = vadd.f32 %v1847, %v1887
    %v1889 = vpop.f32.mrb[0].mxu0
    %v1890 = vadd.f32 %v1849, %v1889
    %v1891 = vpop.f32.mrb[0].mxu0
    %v1892 = vpop.f32.mrb[0].mxu0
    %1893 = vdwg.mxu0
    %1894 = vmatprep.subr.bf16.mxu0 %v1559
    %1895 = vmatpush1.bf16.msra.mxu0 %v1558
    %1896 = vmatprep.subr.bf16.mxu0 %v1563
    %1897 = vmatpush1.bf16.msra.mxu0 %v1562
    %1898 = vmatprep.subr.bf16.mxu0 %v1567
    %1899 = vmatpush1.bf16.msra.mxu0 %v1566
    %1900 = vmatprep.subr.bf16.mxu0 %v1571
    %1901 = vmatpush1.bf16.msra.mxu0 %v1570
    %1902 = vmatprep.subr.bf16.mxu0 %v1575
    %1903 = vmatpush1.bf16.msra.mxu0 %v1574
    %1904 = vmatprep.subr.bf16.mxu0 %v1579
    %1905 = vmatpush1.bf16.msra.mxu0 %v1578
    %1906 = vmatprep.subr.bf16.mxu0 %v1583
    %1907 = vmatpush1.bf16.msra.mxu0 %v1582
    %1908 = vmatprep.subr.bf16.mxu0 %v1587
    %1909 = vmatpush1.bf16.msra.mxu0 %v1586
    %1910 = vmatprep.subr.bf16.mxu0 %v1591
    %1911 = vmatpush1.bf16.msra.mxu0 %v1590
    %1912 = vmatprep.subr.bf16.mxu0 %v1595
    %1913 = vmatpush1.bf16.msra.mxu0 %v1594
    %1914 = vmatprep.subr.bf16.mxu0 %v1599
    %1915 = vmatpush1.bf16.msra.mxu0 %v1598
    %1916 = vmatprep.subr.bf16.mxu0 %v1603
    %1917 = vmatpush1.bf16.msra.mxu0 %v1602
    %1918 = vmatprep.subr.bf16.mxu0 %v1607
    %1919 = vmatpush1.bf16.msra.mxu0 %v1606
    %1920 = vmatprep.subr.bf16.mxu0 %v1611
    %1921 = vmatpush1.bf16.msra.mxu0 %v1610
    %1922 = vmatprep.subr.bf16.mxu0 %v1615
    %1923 = vmatpush1.bf16.msra.mxu0 %v1614
    %1924 = vmatprep.subr.bf16.mxu0 %v1619
    %1925 = vmatpush1.bf16.msra.mxu0 %v1618
    %1926 = vmatprep.mubr.bf16.mxu0 %v1020
    %1927 = vmatmul.mubr.bf16.gmra.mrb[0].mxu0 %v1019
    %v1928 = vpop.f32.mrb[0].mxu0
    %v1929 = vadd.f32 %v1163, %v1928
    %v1930 = vpop.f32.mrb[0].mxu0
    %v1931 = vadd.f32 %v1167, %v1930
    %v1932 = vpop.f32.mrb[0].mxu0
    %v1933 = vpop.f32.mrb[0].mxu0
    %1934 = vdwg.mxu0
    %1935 = vmatprep.subr.bf16.mxu0 %v1623
    %1936 = vmatpush1.bf16.msra.mxu0 %v1622
    %1937 = vmatprep.subr.bf16.mxu0 %v1627
    %1938 = vmatpush1.bf16.msra.mxu0 %v1626
    %1939 = vmatprep.subr.bf16.mxu0 %v1631
    %1940 = vmatpush1.bf16.msra.mxu0 %v1630
    %1941 = vmatprep.subr.bf16.mxu0 %v1635
    %1942 = vmatpush1.bf16.msra.mxu0 %v1634
    %1943 = vmatprep.subr.bf16.mxu0 %v1639
    %1944 = vmatpush1.bf16.msra.mxu0 %v1638
    %1945 = vmatprep.subr.bf16.mxu0 %v1643
    %1946 = vmatpush1.bf16.msra.mxu0 %v1642
    %1947 = vmatprep.subr.bf16.mxu0 %v1647
    %1948 = vmatpush1.bf16.msra.mxu0 %v1646
    %1949 = vmatprep.subr.bf16.mxu0 %v1651
    %1950 = vmatpush1.bf16.msra.mxu0 %v1650
    %1951 = vmatprep.subr.bf16.mxu0 %v1655
    %1952 = vmatpush1.bf16.msra.mxu0 %v1654
    %1953 = vmatprep.subr.bf16.mxu0 %v1659
    %1954 = vmatpush1.bf16.msra.mxu0 %v1658
    %1955 = vmatprep.subr.bf16.mxu0 %v1663
    %1956 = vmatpush1.bf16.msra.mxu0 %v1662
    %1957 = vmatprep.subr.bf16.mxu0 %v1667
    %1958 = vmatpush1.bf16.msra.mxu0 %v1666
    %1959 = vmatprep.subr.bf16.mxu0 %v1671
    %1960 = vmatpush1.bf16.msra.mxu0 %v1670
    %1961 = vmatprep.subr.bf16.mxu0 %v1675
    %1962 = vmatpush1.bf16.msra.mxu0 %v1674
    %1963 = vmatprep.subr.bf16.mxu0 %v1679
    %1964 = vmatpush1.bf16.msra.mxu0 %v1678
    %1965 = vmatprep.subr.bf16.mxu0 %v1683
    %1966 = vmatpush1.bf16.msra.mxu0 %v1682
    %1967 = vmatprep.mubr.bf16.mxu0 %v1022
    %1968 = vmatmul.mubr.bf16.gmra.mrb[0].mxu0 %v1021
    %v1969 = vpop.f32.mrb[0].mxu0
    %v1970 = vadd.f32 %v1929, %v1969
    %v1971 = vpop.f32.mrb[0].mxu0
    %v1972 = vadd.f32 %v1931, %v1971
    %v1973 = vpop.f32.mrb[0].mxu0
    %v1974 = vpop.f32.mrb[0].mxu0
    %1975 = vdwg.mxu0
    %v1976 = vmax.f32 %v1888, 0.0
    %v1977 = vmax.f32 %v1890, 0.0
    %v1978 = vmax.f32 %v1970, 0.0
    %v1979 = vmax.f32 %v1972, 0.0
    %v1980 = vpack.c.bf16 %v1976, %v1976
    %v1981 = vpack.c.bf16 %v1977, %v1977
    %v1982 = vpack.c.bf16 %v1978, %v1978
    %v1983 = vpack.c.bf16 %v1979, %v1979
    %v1984 = vld [vmem:[#allocation8] sm:$0xff]
    %v1985 = vld [vmem:[#allocation8 + $0x8] sm:$0xff]
    %v1986 = vld [vmem:[#allocation8 + $0x10] sm:$0xff]
    %v1987 = vld [vmem:[#allocation8 + $0x18] sm:$0xff]
    %v1988 = vld [vmem:[#allocation8 + $0x20] sm:$0xff]
    %v1989 = vld [vmem:[#allocation8 + $0x28] sm:$0xff]
    %v1990 = vld [vmem:[#allocation8 + $0x30] sm:$0xff]
    %v1991 = vld [vmem:[#allocation8 + $0x38] sm:$0xff]
    %v1992 = vld [vmem:[#allocation8 + $0x40] sm:$0xff]
    %v1993 = vld [vmem:[#allocation8 + $0x48] sm:$0xff]
    %v1994 = vld [vmem:[#allocation8 + $0x50] sm:$0xff]
    %v1995 = vld [vmem:[#allocation8 + $0x58] sm:$0xff]
    %v1996 = vld [vmem:[#allocation8 + $0x60] sm:$0xff]
    %v1997 = vld [vmem:[#allocation8 + $0x68] sm:$0xff]
    %v1998 = vld [vmem:[#allocation8 + $0x70] sm:$0xff]
    %v1999 = vld [vmem:[#allocation8 + $0x78] sm:$0xff]
    %v2000 = vld [vmem:[#allocation8 + $0x80] sm:$0xff]
    %v2001 = vld [vmem:[#allocation8 + $0x88] sm:$0xff]
    %v2002 = vld [vmem:[#allocation8 + $0x90] sm:$0xff]
    %v2003 = vld [vmem:[#allocation8 + $0x98] sm:$0xff]
    %v2004 = vld [vmem:[#allocation8 + $0xa0] sm:$0xff]
    %v2005 = vld [vmem:[#allocation8 + $0xa8] sm:$0xff]
    %v2006 = vld [vmem:[#allocation8 + $0xb0] sm:$0xff]
    %v2007 = vld [vmem:[#allocation8 + $0xb8] sm:$0xff]
    %v2008 = vld [vmem:[#allocation8 + $0xc0] sm:$0xff]
    %v2009 = vld [vmem:[#allocation8 + $0xc8] sm:$0xff]
    %v2010 = vld [vmem:[#allocation8 + $0xd0] sm:$0xff]
    %v2011 = vld [vmem:[#allocation8 + $0xd8] sm:$0xff]
    %v2012 = vld [vmem:[#allocation8 + $0xe0] sm:$0xff]
    %v2013 = vld [vmem:[#allocation8 + $0xe8] sm:$0xff]
    %v2014 = vld [vmem:[#allocation8 + $0xf0] sm:$0xff]
    %v2015 = vld [vmem:[#allocation8 + $0xf8] sm:$0xff]
    %v2016 = vld [vmem:[#allocation8 + $0x100] sm:$0xff]
    %v2017 = vld [vmem:[#allocation8 + $0x108] sm:$0xff]
    %v2018 = vld [vmem:[#allocation8 + $0x110] sm:$0xff]
    %v2019 = vld [vmem:[#allocation8 + $0x118] sm:$0xff]
    %v2020 = vld [vmem:[#allocation8 + $0x120] sm:$0xff]
    %v2021 = vld [vmem:[#allocation8 + $0x128] sm:$0xff]
    %v2022 = vld [vmem:[#allocation8 + $0x130] sm:$0xff]
    %v2023 = vld [vmem:[#allocation8 + $0x138] sm:$0xff]
    %v2024 = vld [vmem:[#allocation8 + $0x140] sm:$0xff]
    %v2025 = vld [vmem:[#allocation8 + $0x148] sm:$0xff]
    %v2026 = vld [vmem:[#allocation8 + $0x150] sm:$0xff]
    %v2027 = vld [vmem:[#allocation8 + $0x158] sm:$0xff]
    %v2028 = vld [vmem:[#allocation8 + $0x160] sm:$0xff]
    %v2029 = vld [vmem:[#allocation8 + $0x168] sm:$0xff]
    %v2030 = vld [vmem:[#allocation8 + $0x170] sm:$0xff]
    %v2031 = vld [vmem:[#allocation8 + $0x178] sm:$0xff]
    %v2032 = vld [vmem:[#allocation8 + $0x180] sm:$0xff]
    %v2033 = vld [vmem:[#allocation8 + $0x188] sm:$0xff]
    %v2034 = vld [vmem:[#allocation8 + $0x190] sm:$0xff]
    %v2035 = vld [vmem:[#allocation8 + $0x198] sm:$0xff]
    %v2036 = vld [vmem:[#allocation8 + $0x1a0] sm:$0xff]
    %v2037 = vld [vmem:[#allocation8 + $0x1a8] sm:$0xff]
    %v2038 = vld [vmem:[#allocation8 + $0x1b0] sm:$0xff]
    %v2039 = vld [vmem:[#allocation8 + $0x1b8] sm:$0xff]
    %v2040 = vld [vmem:[#allocation8 + $0x1c0] sm:$0xff]
    %v2041 = vld [vmem:[#allocation8 + $0x1c8] sm:$0xff]
    %v2042 = vld [vmem:[#allocation8 + $0x1d0] sm:$0xff]
    %v2043 = vld [vmem:[#allocation8 + $0x1d8] sm:$0xff]
    %v2044 = vld [vmem:[#allocation8 + $0x1e0] sm:$0xff]
    %v2045 = vld [vmem:[#allocation8 + $0x1e8] sm:$0xff]
    %v2046 = vld [vmem:[#allocation8 + $0x1f0] sm:$0xff]
    %v2047 = vld [vmem:[#allocation8 + $0x1f8] sm:$0xff]
    %v2048 = vld [vmem:[#allocation8 + $0x200] sm:$0xff]
    %v2049 = vld [vmem:[#allocation8 + $0x208] sm:$0xff]
    %v2050 = vld [vmem:[#allocation8 + $0x210] sm:$0xff]
    %v2051 = vld [vmem:[#allocation8 + $0x218] sm:$0xff]
    %v2052 = vld [vmem:[#allocation8 + $0x220] sm:$0xff]
    %v2053 = vld [vmem:[#allocation8 + $0x228] sm:$0xff]
    %v2054 = vld [vmem:[#allocation8 + $0x230] sm:$0xff]
    %v2055 = vld [vmem:[#allocation8 + $0x238] sm:$0xff]
    %v2056 = vld [vmem:[#allocation8 + $0x240] sm:$0xff]
    %v2057 = vld [vmem:[#allocation8 + $0x248] sm:$0xff]
    %v2058 = vld [vmem:[#allocation8 + $0x250] sm:$0xff]
    %v2059 = vld [vmem:[#allocation8 + $0x258] sm:$0xff]
    %v2060 = vld [vmem:[#allocation8 + $0x260] sm:$0xff]
    %v2061 = vld [vmem:[#allocation8 + $0x268] sm:$0xff]
    %v2062 = vld [vmem:[#allocation8 + $0x270] sm:$0xff]
    %v2063 = vld [vmem:[#allocation8 + $0x278] sm:$0xff]
    %v2064 = vld [vmem:[#allocation8 + $0x280] sm:$0xff]
    %v2065 = vld [vmem:[#allocation8 + $0x288] sm:$0xff]
    %v2066 = vld [vmem:[#allocation8 + $0x290] sm:$0xff]
    %v2067 = vld [vmem:[#allocation8 + $0x298] sm:$0xff]
    %v2068 = vld [vmem:[#allocation8 + $0x2a0] sm:$0xff]
    %v2069 = vld [vmem:[#allocation8 + $0x2a8] sm:$0xff]
    %v2070 = vld [vmem:[#allocation8 + $0x2b0] sm:$0xff]
    %v2071 = vld [vmem:[#allocation8 + $0x2b8] sm:$0xff]
    %v2072 = vld [vmem:[#allocation8 + $0x2c0] sm:$0xff]
    %v2073 = vld [vmem:[#allocation8 + $0x2c8] sm:$0xff]
    %v2074 = vld [vmem:[#allocation8 + $0x2d0] sm:$0xff]
    %v2075 = vld [vmem:[#allocation8 + $0x2d8] sm:$0xff]
    %v2076 = vld [vmem:[#allocation8 + $0x2e0] sm:$0xff]
    %v2077 = vld [vmem:[#allocation8 + $0x2e8] sm:$0xff]
    %v2078 = vld [vmem:[#allocation8 + $0x2f0] sm:$0xff]
    %v2079 = vld [vmem:[#allocation8 + $0x2f8] sm:$0xff]
    %v2080 = vld [vmem:[#allocation8 + $0x300] sm:$0xff]
    %v2081 = vld [vmem:[#allocation8 + $0x308] sm:$0xff]
    %v2082 = vld [vmem:[#allocation8 + $0x310] sm:$0xff]
    %v2083 = vld [vmem:[#allocation8 + $0x318] sm:$0xff]
    %v2084 = vld [vmem:[#allocation8 + $0x320] sm:$0xff]
    %v2085 = vld [vmem:[#allocation8 + $0x328] sm:$0xff]
    %v2086 = vld [vmem:[#allocation8 + $0x330] sm:$0xff]
    %v2087 = vld [vmem:[#allocation8 + $0x338] sm:$0xff]
    %v2088 = vld [vmem:[#allocation8 + $0x340] sm:$0xff]
    %v2089 = vld [vmem:[#allocation8 + $0x348] sm:$0xff]
    %v2090 = vld [vmem:[#allocation8 + $0x350] sm:$0xff]
    %v2091 = vld [vmem:[#allocation8 + $0x358] sm:$0xff]
    %v2092 = vld [vmem:[#allocation8 + $0x360] sm:$0xff]
    %v2093 = vld [vmem:[#allocation8 + $0x368] sm:$0xff]
    %v2094 = vld [vmem:[#allocation8 + $0x370] sm:$0xff]
    %v2095 = vld [vmem:[#allocation8 + $0x378] sm:$0xff]
    %v2096 = vld [vmem:[#allocation8 + $0x380] sm:$0xff]
    %v2097 = vld [vmem:[#allocation8 + $0x388] sm:$0xff]
    %v2098 = vld [vmem:[#allocation8 + $0x390] sm:$0xff]
    %v2099 = vld [vmem:[#allocation8 + $0x398] sm:$0xff]
    %v2100 = vld [vmem:[#allocation8 + $0x3a0] sm:$0xff]
    %v2101 = vld [vmem:[#allocation8 + $0x3a8] sm:$0xff]
    %v2102 = vld [vmem:[#allocation8 + $0x3b0] sm:$0xff]
    %v2103 = vld [vmem:[#allocation8 + $0x3b8] sm:$0xff]
    %v2104 = vld [vmem:[#allocation8 + $0x3c0] sm:$0xff]
    %v2105 = vld [vmem:[#allocation8 + $0x3c8] sm:$0xff]
    %v2106 = vld [vmem:[#allocation8 + $0x3d0] sm:$0xff]
    %v2107 = vld [vmem:[#allocation8 + $0x3d8] sm:$0xff]
    %v2108 = vld [vmem:[#allocation8 + $0x3e0] sm:$0xff]
    %v2109 = vld [vmem:[#allocation8 + $0x3e8] sm:$0xff]
    %v2110 = vld [vmem:[#allocation8 + $0x3f0] sm:$0xff]
    %v2111 = vld [vmem:[#allocation8 + $0x3f8] sm:$0xff]
    %v2240 = vunpack.c.l.b16 %v1984
    %v2241 = vunpack.c.h.b16 %v1984
    %v2242 = vunpack.c.l.b16 %v1985
    %v2243 = vunpack.c.h.b16 %v1985
    %v2244 = vunpack.c.l.b16 %v1986
    %v2245 = vunpack.c.h.b16 %v1986
    %v2246 = vunpack.c.l.b16 %v1987
    %v2247 = vunpack.c.h.b16 %v1987
    %v2248 = vunpack.c.l.b16 %v1988
    %v2249 = vunpack.c.h.b16 %v1988
    %v2250 = vunpack.c.l.b16 %v1989
    %v2251 = vunpack.c.h.b16 %v1989
    %v2252 = vunpack.c.l.b16 %v1990
    %v2253 = vunpack.c.h.b16 %v1990
    %v2254 = vunpack.c.l.b16 %v1991
    %v2255 = vunpack.c.h.b16 %v1991
    %v2256 = vunpack.c.l.b16 %v1992
    %v2257 = vunpack.c.h.b16 %v1992
    %v2258 = vunpack.c.l.b16 %v1993
    %v2259 = vunpack.c.h.b16 %v1993
    %v2260 = vunpack.c.l.b16 %v1994
    %v2261 = vunpack.c.h.b16 %v1994
    %v2262 = vunpack.c.l.b16 %v1995
    %v2263 = vunpack.c.h.b16 %v1995
    %v2264 = vunpack.c.l.b16 %v1996
    %v2265 = vunpack.c.h.b16 %v1996
    %v2266 = vunpack.c.l.b16 %v1997
    %v2267 = vunpack.c.h.b16 %v1997
    %v2268 = vunpack.c.l.b16 %v1998
    %v2269 = vunpack.c.h.b16 %v1998
    %v2270 = vunpack.c.l.b16 %v1999
    %v2271 = vunpack.c.h.b16 %v1999
    %v2272 = vunpack.c.l.b16 %v2000
    %v2273 = vunpack.c.h.b16 %v2000
    %v2274 = vunpack.c.l.b16 %v2001
    %v2275 = vunpack.c.h.b16 %v2001
    %v2276 = vunpack.c.l.b16 %v2002
    %v2277 = vunpack.c.h.b16 %v2002
    %v2278 = vunpack.c.l.b16 %v2003
    %v2279 = vunpack.c.h.b16 %v2003
    %v2280 = vunpack.c.l.b16 %v2004
    %v2281 = vunpack.c.h.b16 %v2004
    %v2282 = vunpack.c.l.b16 %v2005
    %v2283 = vunpack.c.h.b16 %v2005
    %v2284 = vunpack.c.l.b16 %v2006
    %v2285 = vunpack.c.h.b16 %v2006
    %v2286 = vunpack.c.l.b16 %v2007
    %v2287 = vunpack.c.h.b16 %v2007
    %v2288 = vunpack.c.l.b16 %v2008
    %v2289 = vunpack.c.h.b16 %v2008
    %v2290 = vunpack.c.l.b16 %v2009
    %v2291 = vunpack.c.h.b16 %v2009
    %v2292 = vunpack.c.l.b16 %v2010
    %v2293 = vunpack.c.h.b16 %v2010
    %v2294 = vunpack.c.l.b16 %v2011
    %v2295 = vunpack.c.h.b16 %v2011
    %v2296 = vunpack.c.l.b16 %v2012
    %v2297 = vunpack.c.h.b16 %v2012
    %v2298 = vunpack.c.l.b16 %v2013
    %v2299 = vunpack.c.h.b16 %v2013
    %v2300 = vunpack.c.l.b16 %v2014
    %v2301 = vunpack.c.h.b16 %v2014
    %v2302 = vunpack.c.l.b16 %v2015
    %v2303 = vunpack.c.h.b16 %v2015
    %v2304 = vunpack.c.l.b16 %v2016
    %v2305 = vunpack.c.h.b16 %v2016
    %v2306 = vunpack.c.l.b16 %v2017
    %v2307 = vunpack.c.h.b16 %v2017
    %v2308 = vunpack.c.l.b16 %v2018
    %v2309 = vunpack.c.h.b16 %v2018
    %v2310 = vunpack.c.l.b16 %v2019
    %v2311 = vunpack.c.h.b16 %v2019
    %v2312 = vunpack.c.l.b16 %v2020
    %v2313 = vunpack.c.h.b16 %v2020
    %v2314 = vunpack.c.l.b16 %v2021
    %v2315 = vunpack.c.h.b16 %v2021
    %v2316 = vunpack.c.l.b16 %v2022
    %v2317 = vunpack.c.h.b16 %v2022
    %v2318 = vunpack.c.l.b16 %v2023
    %v2319 = vunpack.c.h.b16 %v2023
    %v2320 = vunpack.c.l.b16 %v2024
    %v2321 = vunpack.c.h.b16 %v2024
    %v2322 = vunpack.c.l.b16 %v2025
    %v2323 = vunpack.c.h.b16 %v2025
    %v2324 = vunpack.c.l.b16 %v2026
    %v2325 = vunpack.c.h.b16 %v2026
    %v2326 = vunpack.c.l.b16 %v2027
    %v2327 = vunpack.c.h.b16 %v2027
    %v2328 = vunpack.c.l.b16 %v2028
    %v2329 = vunpack.c.h.b16 %v2028
    %v2330 = vunpack.c.l.b16 %v2029
    %v2331 = vunpack.c.h.b16 %v2029
    %v2332 = vunpack.c.l.b16 %v2030
    %v2333 = vunpack.c.h.b16 %v2030
    %v2334 = vunpack.c.l.b16 %v2031
    %v2335 = vunpack.c.h.b16 %v2031
    %v2336 = vunpack.c.l.b16 %v2032
    %v2337 = vunpack.c.h.b16 %v2032
    %v2338 = vunpack.c.l.b16 %v2033
    %v2339 = vunpack.c.h.b16 %v2033
    %v2340 = vunpack.c.l.b16 %v2034
    %v2341 = vunpack.c.h.b16 %v2034
    %v2342 = vunpack.c.l.b16 %v2035
    %v2343 = vunpack.c.h.b16 %v2035
    %v2344 = vunpack.c.l.b16 %v2036
    %v2345 = vunpack.c.h.b16 %v2036
    %v2346 = vunpack.c.l.b16 %v2037
    %v2347 = vunpack.c.h.b16 %v2037
    %v2348 = vunpack.c.l.b16 %v2038
    %v2349 = vunpack.c.h.b16 %v2038
    %v2350 = vunpack.c.l.b16 %v2039
    %v2351 = vunpack.c.h.b16 %v2039
    %v2352 = vunpack.c.l.b16 %v2040
    %v2353 = vunpack.c.h.b16 %v2040
    %v2354 = vunpack.c.l.b16 %v2041
    %v2355 = vunpack.c.h.b16 %v2041
    %v2356 = vunpack.c.l.b16 %v2042
    %v2357 = vunpack.c.h.b16 %v2042
    %v2358 = vunpack.c.l.b16 %v2043
    %v2359 = vunpack.c.h.b16 %v2043
    %v2360 = vunpack.c.l.b16 %v2044
    %v2361 = vunpack.c.h.b16 %v2044
    %v2362 = vunpack.c.l.b16 %v2045
    %v2363 = vunpack.c.h.b16 %v2045
    %v2364 = vunpack.c.l.b16 %v2046
    %v2365 = vunpack.c.h.b16 %v2046
    %v2366 = vunpack.c.l.b16 %v2047
    %v2367 = vunpack.c.h.b16 %v2047
    %v2368 = vunpack.c.l.b16 %v2048
    %v2369 = vunpack.c.h.b16 %v2048
    %v2370 = vunpack.c.l.b16 %v2049
    %v2371 = vunpack.c.h.b16 %v2049
    %v2372 = vunpack.c.l.b16 %v2050
    %v2373 = vunpack.c.h.b16 %v2050
    %v2374 = vunpack.c.l.b16 %v2051
    %v2375 = vunpack.c.h.b16 %v2051
    %v2376 = vunpack.c.l.b16 %v2052
    %v2377 = vunpack.c.h.b16 %v2052
    %v2378 = vunpack.c.l.b16 %v2053
    %v2379 = vunpack.c.h.b16 %v2053
    %v2380 = vunpack.c.l.b16 %v2054
    %v2381 = vunpack.c.h.b16 %v2054
    %v2382 = vunpack.c.l.b16 %v2055
    %v2383 = vunpack.c.h.b16 %v2055
    %v2384 = vunpack.c.l.b16 %v2056
    %v2385 = vunpack.c.h.b16 %v2056
    %v2386 = vunpack.c.l.b16 %v2057
    %v2387 = vunpack.c.h.b16 %v2057
    %v2388 = vunpack.c.l.b16 %v2058
    %v2389 = vunpack.c.h.b16 %v2058
    %v2390 = vunpack.c.l.b16 %v2059
    %v2391 = vunpack.c.h.b16 %v2059
    %v2392 = vunpack.c.l.b16 %v2060
    %v2393 = vunpack.c.h.b16 %v2060
    %v2394 = vunpack.c.l.b16 %v2061
    %v2395 = vunpack.c.h.b16 %v2061
    %v2396 = vunpack.c.l.b16 %v2062
    %v2397 = vunpack.c.h.b16 %v2062
    %v2398 = vunpack.c.l.b16 %v2063
    %v2399 = vunpack.c.h.b16 %v2063
    %v2400 = vunpack.c.l.b16 %v2064
    %v2401 = vunpack.c.h.b16 %v2064
    %v2402 = vunpack.c.l.b16 %v2065
    %v2403 = vunpack.c.h.b16 %v2065
    %v2404 = vunpack.c.l.b16 %v2066
    %v2405 = vunpack.c.h.b16 %v2066
    %v2406 = vunpack.c.l.b16 %v2067
    %v2407 = vunpack.c.h.b16 %v2067
    %v2408 = vunpack.c.l.b16 %v2068
    %v2409 = vunpack.c.h.b16 %v2068
    %v2410 = vunpack.c.l.b16 %v2069
    %v2411 = vunpack.c.h.b16 %v2069
    %v2412 = vunpack.c.l.b16 %v2070
    %v2413 = vunpack.c.h.b16 %v2070
    %v2414 = vunpack.c.l.b16 %v2071
    %v2415 = vunpack.c.h.b16 %v2071
    %v2416 = vunpack.c.l.b16 %v2072
    %v2417 = vunpack.c.h.b16 %v2072
    %v2418 = vunpack.c.l.b16 %v2073
    %v2419 = vunpack.c.h.b16 %v2073
    %v2420 = vunpack.c.l.b16 %v2074
    %v2421 = vunpack.c.h.b16 %v2074
    %v2422 = vunpack.c.l.b16 %v2075
    %v2423 = vunpack.c.h.b16 %v2075
    %v2424 = vunpack.c.l.b16 %v2076
    %v2425 = vunpack.c.h.b16 %v2076
    %v2426 = vunpack.c.l.b16 %v2077
    %v2427 = vunpack.c.h.b16 %v2077
    %v2428 = vunpack.c.l.b16 %v2078
    %v2429 = vunpack.c.h.b16 %v2078
    %v2430 = vunpack.c.l.b16 %v2079
    %v2431 = vunpack.c.h.b16 %v2079
    %v2432 = vunpack.c.l.b16 %v2080
    %v2433 = vunpack.c.h.b16 %v2080
    %v2434 = vunpack.c.l.b16 %v2081
    %v2435 = vunpack.c.h.b16 %v2081
    %v2436 = vunpack.c.l.b16 %v2082
    %v2437 = vunpack.c.h.b16 %v2082
    %v2438 = vunpack.c.l.b16 %v2083
    %v2439 = vunpack.c.h.b16 %v2083
    %v2440 = vunpack.c.l.b16 %v2084
    %v2441 = vunpack.c.h.b16 %v2084
    %v2442 = vunpack.c.l.b16 %v2085
    %v2443 = vunpack.c.h.b16 %v2085
    %v2444 = vunpack.c.l.b16 %v2086
    %v2445 = vunpack.c.h.b16 %v2086
    %v2446 = vunpack.c.l.b16 %v2087
    %v2447 = vunpack.c.h.b16 %v2087
    %v2448 = vunpack.c.l.b16 %v2088
    %v2449 = vunpack.c.h.b16 %v2088
    %v2450 = vunpack.c.l.b16 %v2089
    %v2451 = vunpack.c.h.b16 %v2089
    %v2452 = vunpack.c.l.b16 %v2090
    %v2453 = vunpack.c.h.b16 %v2090
    %v2454 = vunpack.c.l.b16 %v2091
    %v2455 = vunpack.c.h.b16 %v2091
    %v2456 = vunpack.c.l.b16 %v2092
    %v2457 = vunpack.c.h.b16 %v2092
    %v2458 = vunpack.c.l.b16 %v2093
    %v2459 = vunpack.c.h.b16 %v2093
    %v2460 = vunpack.c.l.b16 %v2094
    %v2461 = vunpack.c.h.b16 %v2094
    %v2462 = vunpack.c.l.b16 %v2095
    %v2463 = vunpack.c.h.b16 %v2095
    %v2464 = vunpack.c.l.b16 %v2096
    %v2465 = vunpack.c.h.b16 %v2096
    %v2466 = vunpack.c.l.b16 %v2097
    %v2467 = vunpack.c.h.b16 %v2097
    %v2468 = vunpack.c.l.b16 %v2098
    %v2469 = vunpack.c.h.b16 %v2098
    %v2470 = vunpack.c.l.b16 %v2099
    %v2471 = vunpack.c.h.b16 %v2099
    %v2472 = vunpack.c.l.b16 %v2100
    %v2473 = vunpack.c.h.b16 %v2100
    %v2474 = vunpack.c.l.b16 %v2101
    %v2475 = vunpack.c.h.b16 %v2101
    %v2476 = vunpack.c.l.b16 %v2102
    %v2477 = vunpack.c.h.b16 %v2102
    %v2478 = vunpack.c.l.b16 %v2103
    %v2479 = vunpack.c.h.b16 %v2103
    %v2480 = vunpack.c.l.b16 %v2104
    %v2481 = vunpack.c.h.b16 %v2104
    %v2482 = vunpack.c.l.b16 %v2105
    %v2483 = vunpack.c.h.b16 %v2105
    %v2484 = vunpack.c.l.b16 %v2106
    %v2485 = vunpack.c.h.b16 %v2106
    %v2486 = vunpack.c.l.b16 %v2107
    %v2487 = vunpack.c.h.b16 %v2107
    %v2488 = vunpack.c.l.b16 %v2108
    %v2489 = vunpack.c.h.b16 %v2108
    %v2490 = vunpack.c.l.b16 %v2109
    %v2491 = vunpack.c.h.b16 %v2109
    %v2492 = vunpack.c.l.b16 %v2110
    %v2493 = vunpack.c.h.b16 %v2110
    %v2494 = vunpack.c.l.b16 %v2111
    %v2495 = vunpack.c.h.b16 %v2111
    %v2496 = vpack.c.b16 %v2244, %v2240
    %v2497 = vpack.c.b16 %v2245, %v2241
    %v2498 = vpack.c.b16 %v2246, %v2242
    %v2499 = vpack.c.b16 %v2247, %v2243
    %v2500 = vpack.c.b16 %v2252, %v2248
    %v2501 = vpack.c.b16 %v2253, %v2249
    %v2502 = vpack.c.b16 %v2254, %v2250
    %v2503 = vpack.c.b16 %v2255, %v2251
    %v2504 = vpack.c.b16 %v2260, %v2256
    %v2505 = vpack.c.b16 %v2261, %v2257
    %v2506 = vpack.c.b16 %v2262, %v2258
    %v2507 = vpack.c.b16 %v2263, %v2259
    %v2508 = vpack.c.b16 %v2268, %v2264
    %v2509 = vpack.c.b16 %v2269, %v2265
    %v2510 = vpack.c.b16 %v2270, %v2266
    %v2511 = vpack.c.b16 %v2271, %v2267
    %v2512 = vpack.c.b16 %v2276, %v2272
    %v2513 = vpack.c.b16 %v2277, %v2273
    %v2514 = vpack.c.b16 %v2278, %v2274
    %v2515 = vpack.c.b16 %v2279, %v2275
    %v2516 = vpack.c.b16 %v2284, %v2280
    %v2517 = vpack.c.b16 %v2285, %v2281
    %v2518 = vpack.c.b16 %v2286, %v2282
    %v2519 = vpack.c.b16 %v2287, %v2283
    %v2520 = vpack.c.b16 %v2292, %v2288
    %v2521 = vpack.c.b16 %v2293, %v2289
    %v2522 = vpack.c.b16 %v2294, %v2290
    %v2523 = vpack.c.b16 %v2295, %v2291
    %v2524 = vpack.c.b16 %v2300, %v2296
    %v2525 = vpack.c.b16 %v2301, %v2297
    %v2526 = vpack.c.b16 %v2302, %v2298
    %v2527 = vpack.c.b16 %v2303, %v2299
    %v2528 = vpack.c.b16 %v2308, %v2304
    %v2529 = vpack.c.b16 %v2309, %v2305
    %v2530 = vpack.c.b16 %v2310, %v2306
    %v2531 = vpack.c.b16 %v2311, %v2307
    %v2532 = vpack.c.b16 %v2316, %v2312
    %v2533 = vpack.c.b16 %v2317, %v2313
    %v2534 = vpack.c.b16 %v2318, %v2314
    %v2535 = vpack.c.b16 %v2319, %v2315
    %v2536 = vpack.c.b16 %v2324, %v2320
    %v2537 = vpack.c.b16 %v2325, %v2321
    %v2538 = vpack.c.b16 %v2326, %v2322
    %v2539 = vpack.c.b16 %v2327, %v2323
    %v2540 = vpack.c.b16 %v2332, %v2328
    %v2541 = vpack.c.b16 %v2333, %v2329
    %v2542 = vpack.c.b16 %v2334, %v2330
    %v2543 = vpack.c.b16 %v2335, %v2331
    %v2544 = vpack.c.b16 %v2340, %v2336
    %v2545 = vpack.c.b16 %v2341, %v2337
    %v2546 = vpack.c.b16 %v2342, %v2338
    %v2547 = vpack.c.b16 %v2343, %v2339
    %v2548 = vpack.c.b16 %v2348, %v2344
    %v2549 = vpack.c.b16 %v2349, %v2345
    %v2550 = vpack.c.b16 %v2350, %v2346
    %v2551 = vpack.c.b16 %v2351, %v2347
    %v2552 = vpack.c.b16 %v2356, %v2352
    %v2553 = vpack.c.b16 %v2357, %v2353
    %v2554 = vpack.c.b16 %v2358, %v2354
    %v2555 = vpack.c.b16 %v2359, %v2355
    %v2556 = vpack.c.b16 %v2364, %v2360
    %v2557 = vpack.c.b16 %v2365, %v2361
    %v2558 = vpack.c.b16 %v2366, %v2362
    %v2559 = vpack.c.b16 %v2367, %v2363
    %v2560 = vpack.c.b16 %v2372, %v2368
    %v2561 = vpack.c.b16 %v2373, %v2369
    %v2562 = vpack.c.b16 %v2374, %v2370
    %v2563 = vpack.c.b16 %v2375, %v2371
    %v2564 = vpack.c.b16 %v2380, %v2376
    %v2565 = vpack.c.b16 %v2381, %v2377
    %v2566 = vpack.c.b16 %v2382, %v2378
    %v2567 = vpack.c.b16 %v2383, %v2379
    %v2568 = vpack.c.b16 %v2388, %v2384
    %v2569 = vpack.c.b16 %v2389, %v2385
    %v2570 = vpack.c.b16 %v2390, %v2386
    %v2571 = vpack.c.b16 %v2391, %v2387
    %v2572 = vpack.c.b16 %v2396, %v2392
    %v2573 = vpack.c.b16 %v2397, %v2393
    %v2574 = vpack.c.b16 %v2398, %v2394
    %v2575 = vpack.c.b16 %v2399, %v2395
    %v2576 = vpack.c.b16 %v2404, %v2400
    %v2577 = vpack.c.b16 %v2405, %v2401
    %v2578 = vpack.c.b16 %v2406, %v2402
    %v2579 = vpack.c.b16 %v2407, %v2403
    %v2580 = vpack.c.b16 %v2412, %v2408
    %v2581 = vpack.c.b16 %v2413, %v2409
    %v2582 = vpack.c.b16 %v2414, %v2410
    %v2583 = vpack.c.b16 %v2415, %v2411
    %v2584 = vpack.c.b16 %v2420, %v2416
    %v2585 = vpack.c.b16 %v2421, %v2417
    %v2586 = vpack.c.b16 %v2422, %v2418
    %v2587 = vpack.c.b16 %v2423, %v2419
    %v2588 = vpack.c.b16 %v2428, %v2424
    %v2589 = vpack.c.b16 %v2429, %v2425
    %v2590 = vpack.c.b16 %v2430, %v2426
    %v2591 = vpack.c.b16 %v2431, %v2427
    %v2592 = vpack.c.b16 %v2436, %v2432
    %v2593 = vpack.c.b16 %v2437, %v2433
    %v2594 = vpack.c.b16 %v2438, %v2434
    %v2595 = vpack.c.b16 %v2439, %v2435
    %v2596 = vpack.c.b16 %v2444, %v2440
    %v2597 = vpack.c.b16 %v2445, %v2441
    %v2598 = vpack.c.b16 %v2446, %v2442
    %v2599 = vpack.c.b16 %v2447, %v2443
    %v2600 = vpack.c.b16 %v2452, %v2448
    %v2601 = vpack.c.b16 %v2453, %v2449
    %v2602 = vpack.c.b16 %v2454, %v2450
    %v2603 = vpack.c.b16 %v2455, %v2451
    %v2604 = vpack.c.b16 %v2460, %v2456
    %v2605 = vpack.c.b16 %v2461, %v2457
    %v2606 = vpack.c.b16 %v2462, %v2458
    %v2607 = vpack.c.b16 %v2463, %v2459
    %v2608 = vpack.c.b16 %v2468, %v2464
    %v2609 = vpack.c.b16 %v2469, %v2465
    %v2610 = vpack.c.b16 %v2470, %v2466
    %v2611 = vpack.c.b16 %v2471, %v2467
    %v2612 = vpack.c.b16 %v2476, %v2472
    %v2613 = vpack.c.b16 %v2477, %v2473
    %v2614 = vpack.c.b16 %v2478, %v2474
    %v2615 = vpack.c.b16 %v2479, %v2475
    %v2616 = vpack.c.b16 %v2484, %v2480
    %v2617 = vpack.c.b16 %v2485, %v2481
    %v2618 = vpack.c.b16 %v2486, %v2482
    %v2619 = vpack.c.b16 %v2487, %v2483
    %v2620 = vpack.c.b16 %v2492, %v2488
    %v2621 = vpack.c.b16 %v2493, %v2489
    %v2622 = vpack.c.b16 %v2494, %v2490
    %v2623 = vpack.c.b16 %v2495, %v2491
    %2752 = vmatprep.subr.bf16.mxu0 %v2497
    %2753 = vmatpush1.bf16.msra.mxu0 %v2496
    %2754 = vmatprep.subr.bf16.mxu0 %v2501
    %2755 = vmatpush1.bf16.msra.mxu0 %v2500
    %2756 = vmatprep.subr.bf16.mxu0 %v2505
    %2757 = vmatpush1.bf16.msra.mxu0 %v2504
    %2758 = vmatprep.subr.bf16.mxu0 %v2509
    %2759 = vmatpush1.bf16.msra.mxu0 %v2508
    %2760 = vmatprep.subr.bf16.mxu0 %v2513
    %2761 = vmatpush1.bf16.msra.mxu0 %v2512
    %2762 = vmatprep.subr.bf16.mxu0 %v2517
    %2763 = vmatpush1.bf16.msra.mxu0 %v2516
    %2764 = vmatprep.subr.bf16.mxu0 %v2521
    %2765 = vmatpush1.bf16.msra.mxu0 %v2520
    %2766 = vmatprep.subr.bf16.mxu0 %v2525
    %2767 = vmatpush1.bf16.msra.mxu0 %v2524
    %2768 = vmatprep.subr.bf16.mxu0 %v2529
    %2769 = vmatpush1.bf16.msra.mxu0 %v2528
    %2770 = vmatprep.subr.bf16.mxu0 %v2533
    %2771 = vmatpush1.bf16.msra.mxu0 %v2532
    %2772 = vmatprep.subr.bf16.mxu0 %v2537
    %2773 = vmatpush1.bf16.msra.mxu0 %v2536
    %2774 = vmatprep.subr.bf16.mxu0 %v2541
    %2775 = vmatpush1.bf16.msra.mxu0 %v2540
    %2776 = vmatprep.subr.bf16.mxu0 %v2545
    %2777 = vmatpush1.bf16.msra.mxu0 %v2544
    %2778 = vmatprep.subr.bf16.mxu0 %v2549
    %2779 = vmatpush1.bf16.msra.mxu0 %v2548
    %2780 = vmatprep.subr.bf16.mxu0 %v2553
    %2781 = vmatpush1.bf16.msra.mxu0 %v2552
    %2782 = vmatprep.subr.bf16.mxu0 %v2557
    %2783 = vmatpush1.bf16.msra.mxu0 %v2556
    %2784 = vmatprep.mubr.bf16.mxu0 %v1981
    %2785 = vmatmul.mubr.bf16.gmra.mrb[0].mxu0 %v1980
    %v2786 = vpop.f32.mrb[0].mxu0
    %v2787 = vadd.f32 %v1155, %v2786
    %v2788 = vpop.f32.mrb[0].mxu0
    %v2789 = vadd.f32 %v1159, %v2788
    %v2790 = vpop.f32.mrb[0].mxu0
    %v2791 = vpop.f32.mrb[0].mxu0
    %2792 = vdwg.mxu0
    %2793 = vmatprep.subr.bf16.mxu0 %v2561
    %2794 = vmatpush1.bf16.msra.mxu0 %v2560
    %2795 = vmatprep.subr.bf16.mxu0 %v2565
    %2796 = vmatpush1.bf16.msra.mxu0 %v2564
    %2797 = vmatprep.subr.bf16.mxu0 %v2569
    %2798 = vmatpush1.bf16.msra.mxu0 %v2568
    %2799 = vmatprep.subr.bf16.mxu0 %v2573
    %2800 = vmatpush1.bf16.msra.mxu0 %v2572
    %2801 = vmatprep.subr.bf16.mxu0 %v2577
    %2802 = vmatpush1.bf16.msra.mxu0 %v2576
    %2803 = vmatprep.subr.bf16.mxu0 %v2581
    %2804 = vmatpush1.bf16.msra.mxu0 %v2580
    %2805 = vmatprep.subr.bf16.mxu0 %v2585
    %2806 = vmatpush1.bf16.msra.mxu0 %v2584
    %2807 = vmatprep.subr.bf16.mxu0 %v2589
    %2808 = vmatpush1.bf16.msra.mxu0 %v2588
    %2809 = vmatprep.subr.bf16.mxu0 %v2593
    %2810 = vmatpush1.bf16.msra.mxu0 %v2592
    %2811 = vmatprep.subr.bf16.mxu0 %v2597
    %2812 = vmatpush1.bf16.msra.mxu0 %v2596
    %2813 = vmatprep.subr.bf16.mxu0 %v2601
    %2814 = vmatpush1.bf16.msra.mxu0 %v2600
    %2815 = vmatprep.subr.bf16.mxu0 %v2605
    %2816 = vmatpush1.bf16.msra.mxu0 %v2604
    %2817 = vmatprep.subr.bf16.mxu0 %v2609
    %2818 = vmatpush1.bf16.msra.mxu0 %v2608
    %2819 = vmatprep.subr.bf16.mxu0 %v2613
    %2820 = vmatpush1.bf16.msra.mxu0 %v2612
    %2821 = vmatprep.subr.bf16.mxu0 %v2617
    %2822 = vmatpush1.bf16.msra.mxu0 %v2616
    %2823 = vmatprep.subr.bf16.mxu0 %v2621
    %2824 = vmatpush1.bf16.msra.mxu0 %v2620
    %2825 = vmatprep.mubr.bf16.mxu0 %v1983
    %2826 = vmatmul.mubr.bf16.gmra.mrb[0].mxu0 %v1982
    %v2827 = vpop.f32.mrb[0].mxu0
    %v2828 = vadd.f32 %v2787, %v2827
    %v2829 = vpop.f32.mrb[0].mxu0
    %v2830 = vadd.f32 %v2789, %v2829
    %v2831 = vpop.f32.mrb[0].mxu0
    %v2832 = vpop.f32.mrb[0].mxu0
    %2833 = vdwg.mxu0
    %2834 = vmatprep.subr.bf16.mxu0 %v2499
    %2835 = vmatpush1.bf16.msra.mxu0 %v2498
    %2836 = vmatprep.subr.bf16.mxu0 %v2503
    %2837 = vmatpush1.bf16.msra.mxu0 %v2502
    %2838 = vmatprep.subr.bf16.mxu0 %v2507
    %2839 = vmatpush1.bf16.msra.mxu0 %v2506
    %2840 = vmatprep.subr.bf16.mxu0 %v2511
    %2841 = vmatpush1.bf16.msra.mxu0 %v2510
    %2842 = vmatprep.subr.bf16.mxu0 %v2515
    %2843 = vmatpush1.bf16.msra.mxu0 %v2514
    %2844 = vmatprep.subr.bf16.mxu0 %v2519
    %2845 = vmatpush1.bf16.msra.mxu0 %v2518
    %2846 = vmatprep.subr.bf16.mxu0 %v2523
    %2847 = vmatpush1.bf16.msra.mxu0 %v2522
    %2848 = vmatprep.subr.bf16.mxu0 %v2527
    %2849 = vmatpush1.bf16.msra.mxu0 %v2526
    %2850 = vmatprep.subr.bf16.mxu0 %v2531
    %2851 = vmatpush1.bf16.msra.mxu0 %v2530
    %2852 = vmatprep.subr.bf16.mxu0 %v2535
    %2853 = vmatpush1.bf16.msra.mxu0 %v2534
    %2854 = vmatprep.subr.bf16.mxu0 %v2539
    %2855 = vmatpush1.bf16.msra.mxu0 %v2538
    %2856 = vmatprep.subr.bf16.mxu0 %v2543
    %2857 = vmatpush1.bf16.msra.mxu0 %v2542
    %2858 = vmatprep.subr.bf16.mxu0 %v2547
    %2859 = vmatpush1.bf16.msra.mxu0 %v2546
    %2860 = vmatprep.subr.bf16.mxu0 %v2551
    %2861 = vmatpush1.bf16.msra.mxu0 %v2550
    %2862 = vmatprep.subr.bf16.mxu0 %v2555
    %2863 = vmatpush1.bf16.msra.mxu0 %v2554
    %2864 = vmatprep.subr.bf16.mxu0 %v2559
    %2865 = vmatpush1.bf16.msra.mxu0 %v2558
    %2866 = vmatprep.mubr.bf16.mxu0 %v1981
    %2867 = vmatmul.mubr.bf16.gmra.mrb[0].mxu0 %v1980
    %v2868 = vpop.f32.mrb[0].mxu0
    %v2869 = vadd.f32 %v1163, %v2868
    %v2870 = vpop.f32.mrb[0].mxu0
    %v2871 = vadd.f32 %v1167, %v2870
    %v2872 = vpop.f32.mrb[0].mxu0
    %v2873 = vpop.f32.mrb[0].mxu0
    %2874 = vdwg.mxu0
    %2875 = vmatprep.subr.bf16.mxu0 %v2563
    %2876 = vmatpush1.bf16.msra.mxu0 %v2562
    %2877 = vmatprep.subr.bf16.mxu0 %v2567
    %2878 = vmatpush1.bf16.msra.mxu0 %v2566
    %2879 = vmatprep.subr.bf16.mxu0 %v2571
    %2880 = vmatpush1.bf16.msra.mxu0 %v2570
    %2881 = vmatprep.subr.bf16.mxu0 %v2575
    %2882 = vmatpush1.bf16.msra.mxu0 %v2574
    %2883 = vmatprep.subr.bf16.mxu0 %v2579
    %2884 = vmatpush1.bf16.msra.mxu0 %v2578
    %2885 = vmatprep.subr.bf16.mxu0 %v2583
    %2886 = vmatpush1.bf16.msra.mxu0 %v2582
    %2887 = vmatprep.subr.bf16.mxu0 %v2587
    %2888 = vmatpush1.bf16.msra.mxu0 %v2586
    %2889 = vmatprep.subr.bf16.mxu0 %v2591
    %2890 = vmatpush1.bf16.msra.mxu0 %v2590
    %2891 = vmatprep.subr.bf16.mxu0 %v2595
    %2892 = vmatpush1.bf16.msra.mxu0 %v2594
    %2893 = vmatprep.subr.bf16.mxu0 %v2599
    %2894 = vmatpush1.bf16.msra.mxu0 %v2598
    %2895 = vmatprep.subr.bf16.mxu0 %v2603
    %2896 = vmatpush1.bf16.msra.mxu0 %v2602
    %2897 = vmatprep.subr.bf16.mxu0 %v2607
    %2898 = vmatpush1.bf16.msra.mxu0 %v2606
    %2899 = vmatprep.subr.bf16.mxu0 %v2611
    %2900 = vmatpush1.bf16.msra.mxu0 %v2610
    %2901 = vmatprep.subr.bf16.mxu0 %v2615
    %2902 = vmatpush1.bf16.msra.mxu0 %v2614
    %2903 = vmatprep.subr.bf16.mxu0 %v2619
    %2904 = vmatpush1.bf16.msra.mxu0 %v2618
    %2905 = vmatprep.subr.bf16.mxu0 %v2623
    %2906 = vmatpush1.bf16.msra.mxu0 %v2622
    %2907 = vmatprep.mubr.bf16.mxu0 %v1983
    %2908 = vmatmul.mubr.bf16.gmra.mrb[0].mxu0 %v1982
    %v2909 = vpop.f32.mrb[0].mxu0
    %v2910 = vadd.f32 %v2869, %v2909
    %v2911 = vpop.f32.mrb[0].mxu0
    %v2912 = vadd.f32 %v2871, %v2911
    %v2913 = vpop.f32.mrb[0].mxu0
    %v2914 = vpop.f32.mrb[0].mxu0
    %2915 = vdwg.mxu0
    %v2916 = vmax.f32 %v2828, 0.0
    %v2917 = vmax.f32 %v2830, 0.0
    %v2918 = vmax.f32 %v2910, 0.0
    %v2919 = vmax.f32 %v2912, 0.0
    %2920 = vst [vmem:[#allocation10] sm:$0xff] %v2916
    %2921 = vst [vmem:[#allocation10 + $0x8] sm:$0xff] %v2917
    %2922 = vst [vmem:[#allocation10 + $0x10] sm:$0xff] %v2918
    %2923 = vst [vmem:[#allocation10 + $0x18] sm:$0xff] %v2919
    // Predicated region
    $region38: #{tpu_custom_call.1} parent=1 // pred_check
      _
    $region39: #{tpu_custom_call.1} parent=1 // pred_check_branch
      %2925 = sbr.rel (0) target = $region41
    $region40: #{tpu_custom_call.1} parent=1 // pred_region
      %s2927 = ssub.s32 512, 512
      %2928 = vsyncadd [#allocation4], %s2927
      %s2930 = sshll.u32 [#allocation10], 4
      %s2931 = int_to_ptr.vmem [resolvable:$true] %s2930
      %2933 = dma.vmem_to_hbm [thread:$0]  %s2931, 512, %s5, [#allocation4]
    $region41: #{tpu_custom_call.1} parent=1 // pred_fallthru
      _
    // Predicated region
    $region42: #{tpu_custom_call.1} parent=1 // pred_check
      _
    $region43: #{tpu_custom_call.1} parent=1 // pred_check_branch
      %2935 = sbr.rel (0) target = $region45
    $region44: #{tpu_custom_call.1} parent=1 // pred_region
      %2936 = dma.done [#allocation4], 512
    $region45: #{tpu_custom_call.1} parent=1 // pred_fallthru
      _
    %2937 = vsyncpa [#allocation3], 1
    %2938 = vsyncpa [#allocation6], 1
    %2939 = vsyncpa [#allocation9], 1
    %2940 = vsyncpa [#allocation4], 1

</llo_original>
